<compile_context>
chip_gen: v6e
topology: v6e:2x2x1
jax: 0.10.0
libtpu: 0.0.40
codegen_flags: <defaults>
</compile_context>

<pallas_src>
import jax
import jax.numpy as jnp
from jax.experimental import pallas as pl
from jax.experimental.pallas import tpu as pltpu


def _conv1x1_kernel(w_ref, x_ref, o_ref):
    # w_ref: (Cout_blk, Cin)   x_ref: (Cin, HW)   o_ref: (Cout_blk, HW)
    o_ref[...] = jnp.dot(
        w_ref[...], x_ref[...], preferred_element_type=jnp.float32
    ).astype(o_ref.dtype)


def _tensorcores_per_chip():
    """Best-effort count of TensorCores sharing this chip's HBM.

    v5e / v6e: 1 TC per chip  -> no benefit from splitting the grid.
    v7x:       2 TCs per chip -> split Cout so each core streams half.
    Any failure (non-TPU backend, unknown kind) falls back to 1, which is
    correct everywhere and only leaves a little parallelism on the table.
    """
    try:
        kind = jax.devices()[0].device_kind.lower()
    except Exception:
        return 1
    return 2 if "v7" in kind else 1


def conv2d_1x1(x_nchw, weight_oi, *, compute_dtype=None):
    """1x1 conv, stride 1, no bias.

    x_nchw:        [N, Cin, H, W]  float32
    weight_oi:     [Cout, Cin]     float32  (the (1,1) kernel dims squeezed out)
    compute_dtype: optional reduced-precision streaming dtype (e.g. bf16);
                   None keeps exact fp32 module semantics.
    returns:       [N, Cout, H, W] float32
    """
    n, cin, h, w = x_nchw.shape
    cout = weight_oi.shape[0]
    hw = h * w
    out_dtype = x_nchw.dtype

    if compute_dtype is not None:
        x_nchw = x_nchw.astype(compute_dtype)
        weight_oi = weight_oi.astype(compute_dtype)

    # NCHW -> (N, Cin, H*W): contiguous reshape, no data movement.
    x_rows = x_nchw.reshape(n, cin, hw)

    # Chip-aware Cout split (only when >1 TC shares HBM and blocks stay
    # sublane-aligned). Everything (~1.7 MB fp32) fits VMEM trivially on all
    # generations, including v7x's 64 MiB, so no K/HW tiling is needed.
    tcs = _tensorcores_per_chip()
    cout_blocks = (
        tcs if (tcs > 1 and cout % tcs == 0 and (cout // tcs) % 8 == 0) else 1
    )
    cout_blk = cout // cout_blocks

    flops = 2 * n * cout * cin * hw
    bytes_accessed = (
        x_rows.size * x_rows.dtype.itemsize
        + weight_oi.size * weight_oi.dtype.itemsize
        + n * cout * hw * jnp.dtype(out_dtype).itemsize
    )

    out = pl.pallas_call(
        _conv1x1_kernel,
        out_shape=jax.ShapeDtypeStruct((n, cout, hw), out_dtype),
        # Weight axis OUTER, batch axis INNER: the weight block index is
        # constant across consecutive (batch) steps, so each weight block is
        # DMA'd once total instead of once per batch element.
        grid=(cout_blocks, n),
        in_specs=[
            # Weight: one Cout block per outer grid step.
            pl.BlockSpec((cout_blk, cin), lambda j, b: (j, 0)),
            # Activations: full (Cin, HW) slab for batch b (leading dim squeezed).
            pl.BlockSpec((None, cin, hw), lambda j, b: (b, 0, 0)),
        ],
        out_specs=pl.BlockSpec((None, cout_blk, hw), lambda j, b: (b, j, 0)),
        compiler_params=pltpu.CompilerParams(
            dimension_semantics=(
                ("parallel", "parallel")
                if cout_blocks > 1
                else ("arbitrary", "arbitrary")
            )
        ),
        cost_estimate=pl.CostEstimate(
            flops=flops, transcendentals=0, bytes_accessed=bytes_accessed
        ),
    )(weight_oi, x_rows)

    # (N, Cout, H*W) -> NCHW: contiguous reshape, no data movement.
    return out.reshape(n, cout, h, w)


if __name__ == "__main__":
    key = jax.random.PRNGKey(0)
    kx, kw = jax.random.split(key)

    # Shapes implied by the module's forward: x400 is [1, 176, 14, 14].
    N, CIN, H, W = 1, 176, 14, 14
    COUT = 1056

    x = jax.random.normal(kx, (N, CIN, H, W), dtype=jnp.float32)
    # Conv2d weight shape is (Cout, Cin, 1, 1); squeeze the spatial dims.
    weight = (
        jax.random.normal(kw, (COUT, CIN, 1, 1), dtype=jnp.float32) * 0.05
    ).reshape(COUT, CIN)

    y = conv2d_1x1(x, weight)  # exact fp32 path (module semantics)
    jax.block_until_ready(y)

    # Cross-check against a plain-JAX reference of the same math.
    ref = jnp.einsum("nchw,oc->nohw", x, weight)
    assert y.shape == (N, COUT, H, W), y.shape
    assert jnp.allclose(y, ref, atol=1e-3, rtol=1e-3), float(
        jnp.max(jnp.abs(y - ref))
    )

    print("KERNEL_OK")
</pallas_src>

<mosaic_0001>
module attributes {stable_mosaic.version = 11 : i64} {
  func.func @_conv1x1_kernel(%arg0: i32, %arg1: i32, %arg2: memref<1056x176xf32, #tpu.memory_space<vmem>>, %arg3: memref<1x176x196xf32, #tpu.memory_space<vmem>>, %arg4: memref<1x1056x196xf32, #tpu.memory_space<vmem>>) attributes {dimension_semantics = [#tpu.dimension_semantics<arbitrary>, #tpu.dimension_semantics<arbitrary>], iteration_bounds = array<i64: 1, 1>, scalar_prefetch = 0 : i64, scratch_operands = 0 : i64, tpu.core_type = #tpu.core_type<tc>, window_params = [{transform_indices = @transform_0, window_bounds = array<i64: 1056, 176>}, {transform_indices = @transform_1, window_bounds = array<i64: 1, 176, 196>}, {transform_indices = @transform_2, window_bounds = array<i64: 1, 1056, 196>}]} {
    %c0 = arith.constant 0 : index
    %c0_0 = arith.constant 0 : index
    %0 = vector.load %arg2[%c0, %c0_0] : memref<1056x176xf32, #tpu.memory_space<vmem>>, vector<1056x176xf32>
    %c0_1 = arith.constant 0 : index
    %c0_2 = arith.constant 0 : index
    %c0_3 = arith.constant 0 : index
    %1 = vector.load %arg3[%c0_1, %c0_2, %c0_3] : memref<1x176x196xf32, #tpu.memory_space<vmem>>, vector<1x176x196xf32>
    %2 = vector.shape_cast %1 : vector<1x176x196xf32> to vector<176x196xf32>
    %cst = arith.constant dense<0.000000e+00> : vector<1056x196xf32>
    %3 = tpu.matmul %0, %2, %cst {dimension_numbers = #tpu.dot_dimension_numbers<[1], [0], [0], [1], [0, 0, 1, 1], [], []>} : vector<1056x176xf32>, vector<176x196xf32>, vector<1056x196xf32> -> vector<1056x196xf32>
    %c0_4 = arith.constant 0 : index
    %c0_5 = arith.constant 0 : index
    %c0_6 = arith.constant 0 : index
    %4 = vector.load %arg4[%c0_4, %c0_5, %c0_6] : memref<1x1056x196xf32, #tpu.memory_space<vmem>>, vector<1x1056x196xf32>
    %5 = vector.shape_cast %4 : vector<1x1056x196xf32> to vector<1056x196xf32>
    %6 = vector.shape_cast %3 : vector<1056x196xf32> to vector<1x1056x196xf32>
    tpu.vector_store %arg4[%c0_4, %c0_5, %c0_6], %6 {strides = array<i32>} : memref<1x1056x196xf32, #tpu.memory_space<vmem>>, vector<1x1056x196xf32>,
    return
  }
  func.func @transform_0(%arg0: i32, %arg1: i32) -> (i32, i32) {
    %c0_i32 = arith.constant 0 : i32
    %c0_i32_0 = arith.constant 0 : i32
    return %arg0, %c0_i32 : i32, i32
  }
  func.func @transform_1(%arg0: i32, %arg1: i32) -> (i32, i32, i32) {
    %c0_i32 = arith.constant 0 : i32
    %c0_i32_0 = arith.constant 0 : i32
    %c0_i32_1 = arith.constant 0 : i32
    return %arg1, %c0_i32, %c0_i32_0 : i32, i32, i32
  }
  func.func @transform_2(%arg0: i32, %arg1: i32) -> (i32, i32, i32) {
    %c0_i32 = arith.constant 0 : i32
    %c0_i32_0 = arith.constant 0 : i32
    return %arg1, %arg0, %c0_i32 : i32, i32, i32
  }
}

</mosaic_0001>

<llo_original>
// kernel: tpu_custom_call.1
$region0: #{tpu_custom_call.1}
  #allocation0 [shape = 'u32[]', space=smem, size = 0x4, offset = 0x4, fixed_abs, tag = 'smem constant byte address 0x4 - core index']
  #allocation1 [shape = 'u32[144,128]{1,0:T(1,128)}', space=vmem, size = 0x12000, scoped, tag = 'internal scratch']
  %s0 = inlined_call_operand.vmem [shape: f32[1056,176], index: 0, kind: input, shape index: {}]
  %s1 = inlined_call_operand.vmem [shape: f32[1,176,196], index: 1, kind: input, shape index: {}]
  %s2 = inlined_call_operand.vmem [shape: f32[1,1056,196], index: 2, kind: output, shape index: {}]
  %s3 = sld [smem:[#allocation0]]
  $region18: #{tpu_custom_call.1} parent=0
    _
  %s5 = ssub.s32 1, %s3
  %s6 = scalar_select 0, %s5, %s3
  // Predicated region
  $region2: #{tpu_custom_call.1} parent=0 // pred_check
    _
  $region3: #{tpu_custom_call.1} parent=0 // pred_check_branch
    %8 = sbr.rel (0) target = $region5
  $region4: #{tpu_custom_call.1} parent=0 // pred_region
    _
  $region5: #{tpu_custom_call.1} parent=0 // pred_fallthru
    _
  // Predicated region
  $region6: #{tpu_custom_call.1} parent=0 // pred_check
    _
  $region7: #{tpu_custom_call.1} parent=0 // pred_check_branch
    %10 = sbr.rel (0) target = $region9
  $region8: #{tpu_custom_call.1} parent=0 // pred_region
    _
  $region9: #{tpu_custom_call.1} parent=0 // pred_fallthru
    _
  %v11 = vld [vmem:[%s0] sm:$0xff]
  %v12 = vld [vmem:[%s0 + $0x8] sm:$0xff]
  %v13 = vld [vmem:[%s0 + $0x10] sm:$0xff]
  %v14 = vld [vmem:[%s0 + $0x18] sm:$0xff]
  %v15 = vld [vmem:[%s0 + $0x20] sm:$0xff]
  %v16 = vld [vmem:[%s0 + $0x28] sm:$0xff]
  %v17 = vld [vmem:[%s0 + $0x30] sm:$0xff]
  %v18 = vld [vmem:[%s0 + $0x38] sm:$0xff]
  %v19 = vld [vmem:[%s0 + $0x40] sm:$0xff]
  %v20 = vld [vmem:[%s0 + $0x48] sm:$0xff]
  %v21 = vld [vmem:[%s0 + $0x50] sm:$0xff]
  %v22 = vld [vmem:[%s0 + $0x58] sm:$0xff]
  %v23 = vld [vmem:[%s0 + $0x60] sm:$0xff]
  %v24 = vld [vmem:[%s0 + $0x68] sm:$0xff]
  %v25 = vld [vmem:[%s0 + $0x70] sm:$0xff]
  %v26 = vld [vmem:[%s0 + $0x78] sm:$0xff]
  %v27 = vld [vmem:[%s0 + $0x80] sm:$0xff]
  %v28 = vld [vmem:[%s0 + $0x88] sm:$0xff]
  %v29 = vld [vmem:[%s0 + $0x90] sm:$0xff]
  %v30 = vld [vmem:[%s0 + $0x98] sm:$0xff]
  %v31 = vld [vmem:[%s0 + $0xa0] sm:$0xff]
  %v32 = vld [vmem:[%s0 + $0xa8] sm:$0xff]
  %v33 = vld [vmem:[%s0 + $0xb0] sm:$0xff]
  %v34 = vld [vmem:[%s0 + $0xb8] sm:$0xff]
  %v35 = vld [vmem:[%s0 + $0xc0] sm:$0xff]
  %v36 = vld [vmem:[%s0 + $0xc8] sm:$0xff]
  %v37 = vld [vmem:[%s0 + $0xd0] sm:$0xff]
  %v38 = vld [vmem:[%s0 + $0xd8] sm:$0xff]
  %v39 = vld [vmem:[%s0 + $0xe0] sm:$0xff]
  %v40 = vld [vmem:[%s0 + $0xe8] sm:$0xff]
  %v41 = vld [vmem:[%s0 + $0xf0] sm:$0xff]
  %v42 = vld [vmem:[%s0 + $0xf8] sm:$0xff]
  %v43 = vld [vmem:[%s0 + $0x100] sm:$0xff]
  %v44 = vld [vmem:[%s0 + $0x108] sm:$0xff]
  %v45 = vld [vmem:[%s0 + $0x110] sm:$0xff]
  %v46 = vld [vmem:[%s0 + $0x118] sm:$0xff]
  %v47 = vld [vmem:[%s0 + $0x120] sm:$0xff]
  %v48 = vld [vmem:[%s0 + $0x128] sm:$0xff]
  %v49 = vld [vmem:[%s0 + $0x130] sm:$0xff]
  %v50 = vld [vmem:[%s0 + $0x138] sm:$0xff]
  %v51 = vld [vmem:[%s0 + $0x140] sm:$0xff]
  %v52 = vld [vmem:[%s0 + $0x148] sm:$0xff]
  %v53 = vld [vmem:[%s0 + $0x150] sm:$0xff]
  %v54 = vld [vmem:[%s0 + $0x158] sm:$0xff]
  %v55 = vld [vmem:[%s0 + $0x160] sm:$0xff]
  %v56 = vld [vmem:[%s0 + $0x168] sm:$0xff]
  %v57 = vld [vmem:[%s0 + $0x170] sm:$0xff]
  %v58 = vld [vmem:[%s0 + $0x178] sm:$0xff]
  %v59 = vld [vmem:[%s0 + $0x180] sm:$0xff]
  %v60 = vld [vmem:[%s0 + $0x188] sm:$0xff]
  %v61 = vld [vmem:[%s0 + $0x190] sm:$0xff]
  %v62 = vld [vmem:[%s0 + $0x198] sm:$0xff]
  %v63 = vld [vmem:[%s0 + $0x1a0] sm:$0xff]
  %v64 = vld [vmem:[%s0 + $0x1a8] sm:$0xff]
  %v65 = vld [vmem:[%s0 + $0x1b0] sm:$0xff]
  %v66 = vld [vmem:[%s0 + $0x1b8] sm:$0xff]
  %v67 = vld [vmem:[%s0 + $0x1c0] sm:$0xff]
  %v68 = vld [vmem:[%s0 + $0x1c8] sm:$0xff]
  %v69 = vld [vmem:[%s0 + $0x1d0] sm:$0xff]
  %v70 = vld [vmem:[%s0 + $0x1d8] sm:$0xff]
  %v71 = vld [vmem:[%s0 + $0x1e0] sm:$0xff]
  %v72 = vld [vmem:[%s0 + $0x1e8] sm:$0xff]
  %v73 = vld [vmem:[%s0 + $0x1f0] sm:$0xff]
  %v74 = vld [vmem:[%s0 + $0x1f8] sm:$0xff]
  %v75 = vld [vmem:[%s0 + $0x200] sm:$0xff]
  %v76 = vld [vmem:[%s0 + $0x208] sm:$0xff]
  %v77 = vld [vmem:[%s0 + $0x210] sm:$0xff]
  %v78 = vld [vmem:[%s0 + $0x218] sm:$0xff]
  %v79 = vld [vmem:[%s0 + $0x220] sm:$0xff]
  %v80 = vld [vmem:[%s0 + $0x228] sm:$0xff]
  %v81 = vld [vmem:[%s0 + $0x230] sm:$0xff]
  %v82 = vld [vmem:[%s0 + $0x238] sm:$0xff]
  %v83 = vld [vmem:[%s0 + $0x240] sm:$0xff]
  %v84 = vld [vmem:[%s0 + $0x248] sm:$0xff]
  %v85 = vld [vmem:[%s0 + $0x250] sm:$0xff]
  %v86 = vld [vmem:[%s0 + $0x258] sm:$0xff]
  %v87 = vld [vmem:[%s0 + $0x260] sm:$0xff]
  %v88 = vld [vmem:[%s0 + $0x268] sm:$0xff]
  %v89 = vld [vmem:[%s0 + $0x270] sm:$0xff]
  %v90 = vld [vmem:[%s0 + $0x278] sm:$0xff]
  %v91 = vld [vmem:[%s0 + $0x280] sm:$0xff]
  %v92 = vld [vmem:[%s0 + $0x288] sm:$0xff]
  %v93 = vld [vmem:[%s0 + $0x290] sm:$0xff]
  %v94 = vld [vmem:[%s0 + $0x298] sm:$0xff]
  %v95 = vld [vmem:[%s0 + $0x2a0] sm:$0xff]
  %v96 = vld [vmem:[%s0 + $0x2a8] sm:$0xff]
  %v97 = vld [vmem:[%s0 + $0x2b0] sm:$0xff]
  %v98 = vld [vmem:[%s0 + $0x2b8] sm:$0xff]
  %v99 = vld [vmem:[%s0 + $0x2c0] sm:$0xff]
  %v100 = vld [vmem:[%s0 + $0x2c8] sm:$0xff]
  %v101 = vld [vmem:[%s0 + $0x2d0] sm:$0xff]
  %v102 = vld [vmem:[%s0 + $0x2d8] sm:$0xff]
  %v103 = vld [vmem:[%s0 + $0x2e0] sm:$0xff]
  %v104 = vld [vmem:[%s0 + $0x2e8] sm:$0xff]
  %v105 = vld [vmem:[%s0 + $0x2f0] sm:$0xff]
  %v106 = vld [vmem:[%s0 + $0x2f8] sm:$0xff]
  %v107 = vld [vmem:[%s0 + $0x300] sm:$0xff]
  %v108 = vld [vmem:[%s0 + $0x308] sm:$0xff]
  %v109 = vld [vmem:[%s0 + $0x310] sm:$0xff]
  %v110 = vld [vmem:[%s0 + $0x318] sm:$0xff]
  %v111 = vld [vmem:[%s0 + $0x320] sm:$0xff]
  %v112 = vld [vmem:[%s0 + $0x328] sm:$0xff]
  %v113 = vld [vmem:[%s0 + $0x330] sm:$0xff]
  %v114 = vld [vmem:[%s0 + $0x338] sm:$0xff]
  %v115 = vld [vmem:[%s0 + $0x340] sm:$0xff]
  %v116 = vld [vmem:[%s0 + $0x348] sm:$0xff]
  %v117 = vld [vmem:[%s0 + $0x350] sm:$0xff]
  %v118 = vld [vmem:[%s0 + $0x358] sm:$0xff]
  %v119 = vld [vmem:[%s0 + $0x360] sm:$0xff]
  %v120 = vld [vmem:[%s0 + $0x368] sm:$0xff]
  %v121 = vld [vmem:[%s0 + $0x370] sm:$0xff]
  %v122 = vld [vmem:[%s0 + $0x378] sm:$0xff]
  %v123 = vld [vmem:[%s0 + $0x380] sm:$0xff]
  %v124 = vld [vmem:[%s0 + $0x388] sm:$0xff]
  %v125 = vld [vmem:[%s0 + $0x390] sm:$0xff]
  %v126 = vld [vmem:[%s0 + $0x398] sm:$0xff]
  %v127 = vld [vmem:[%s0 + $0x3a0] sm:$0xff]
  %v128 = vld [vmem:[%s0 + $0x3a8] sm:$0xff]
  %v129 = vld [vmem:[%s0 + $0x3b0] sm:$0xff]
  %v130 = vld [vmem:[%s0 + $0x3b8] sm:$0xff]
  %v131 = vld [vmem:[%s0 + $0x3c0] sm:$0xff]
  %v132 = vld [vmem:[%s0 + $0x3c8] sm:$0xff]
  %v133 = vld [vmem:[%s0 + $0x3d0] sm:$0xff]
  %v134 = vld [vmem:[%s0 + $0x3d8] sm:$0xff]
  %v135 = vld [vmem:[%s0 + $0x3e0] sm:$0xff]
  %v136 = vld [vmem:[%s0 + $0x3e8] sm:$0xff]
  %v137 = vld [vmem:[%s0 + $0x3f0] sm:$0xff]
  %v138 = vld [vmem:[%s0 + $0x3f8] sm:$0xff]
  %v139 = vld [vmem:[%s0 + $0x400] sm:$0xff]
  %v140 = vld [vmem:[%s0 + $0x408] sm:$0xff]
  %v141 = vld [vmem:[%s0 + $0x410] sm:$0xff]
  %v142 = vld [vmem:[%s0 + $0x418] sm:$0xff]
  %v143 = vld [vmem:[%s0 + $0x420] sm:$0xff]
  %v144 = vld [vmem:[%s0 + $0x428] sm:$0xff]
  %v145 = vld [vmem:[%s0 + $0x430] sm:$0xff]
  %v146 = vld [vmem:[%s0 + $0x438] sm:$0xff]
  %v147 = vld [vmem:[%s0 + $0x440] sm:$0xff]
  %v148 = vld [vmem:[%s0 + $0x448] sm:$0xff]
  %v149 = vld [vmem:[%s0 + $0x450] sm:$0xff]
  %v150 = vld [vmem:[%s0 + $0x458] sm:$0xff]
  %v151 = vld [vmem:[%s0 + $0x460] sm:$0xff]
  %v152 = vld [vmem:[%s0 + $0x468] sm:$0xff]
  %v153 = vld [vmem:[%s0 + $0x470] sm:$0xff]
  %v154 = vld [vmem:[%s0 + $0x478] sm:$0xff]
  %v155 = vld [vmem:[%s0 + $0x480] sm:$0xff]
  %v156 = vld [vmem:[%s0 + $0x488] sm:$0xff]
  %v157 = vld [vmem:[%s0 + $0x490] sm:$0xff]
  %v158 = vld [vmem:[%s0 + $0x498] sm:$0xff]
  %v159 = vld [vmem:[%s0 + $0x4a0] sm:$0xff]
  %v160 = vld [vmem:[%s0 + $0x4a8] sm:$0xff]
  %v161 = vld [vmem:[%s0 + $0x4b0] sm:$0xff]
  %v162 = vld [vmem:[%s0 + $0x4b8] sm:$0xff]
  %v163 = vld [vmem:[%s0 + $0x4c0] sm:$0xff]
  %v164 = vld [vmem:[%s0 + $0x4c8] sm:$0xff]
  %v165 = vld [vmem:[%s0 + $0x4d0] sm:$0xff]
  %v166 = vld [vmem:[%s0 + $0x4d8] sm:$0xff]
  %v167 = vld [vmem:[%s0 + $0x4e0] sm:$0xff]
  %v168 = vld [vmem:[%s0 + $0x4e8] sm:$0xff]
  %v169 = vld [vmem:[%s0 + $0x4f0] sm:$0xff]
  %v170 = vld [vmem:[%s0 + $0x4f8] sm:$0xff]
  %v171 = vld [vmem:[%s0 + $0x500] sm:$0xff]
  %v172 = vld [vmem:[%s0 + $0x508] sm:$0xff]
  %v173 = vld [vmem:[%s0 + $0x510] sm:$0xff]
  %v174 = vld [vmem:[%s0 + $0x518] sm:$0xff]
  %v175 = vld [vmem:[%s0 + $0x520] sm:$0xff]
  %v176 = vld [vmem:[%s0 + $0x528] sm:$0xff]
  %v177 = vld [vmem:[%s0 + $0x530] sm:$0xff]
  %v178 = vld [vmem:[%s0 + $0x538] sm:$0xff]
  %v179 = vld [vmem:[%s0 + $0x540] sm:$0xff]
  %v180 = vld [vmem:[%s0 + $0x548] sm:$0xff]
  %v181 = vld [vmem:[%s0 + $0x550] sm:$0xff]
  %v182 = vld [vmem:[%s0 + $0x558] sm:$0xff]
  %v183 = vld [vmem:[%s0 + $0x560] sm:$0xff]
  %v184 = vld [vmem:[%s0 + $0x568] sm:$0xff]
  %v185 = vld [vmem:[%s0 + $0x570] sm:$0xff]
  %v186 = vld [vmem:[%s0 + $0x578] sm:$0xff]
  %v187 = vld [vmem:[%s0 + $0x580] sm:$0xff]
  %v188 = vld [vmem:[%s0 + $0x588] sm:$0xff]
  %v189 = vld [vmem:[%s0 + $0x590] sm:$0xff]
  %v190 = vld [vmem:[%s0 + $0x598] sm:$0xff]
  %v191 = vld [vmem:[%s0 + $0x5a0] sm:$0xff]
  %v192 = vld [vmem:[%s0 + $0x5a8] sm:$0xff]
  %v193 = vld [vmem:[%s0 + $0x5b0] sm:$0xff]
  %v194 = vld [vmem:[%s0 + $0x5b8] sm:$0xff]
  %v195 = vld [vmem:[%s0 + $0x5c0] sm:$0xff]
  %v196 = vld [vmem:[%s0 + $0x5c8] sm:$0xff]
  %v197 = vld [vmem:[%s0 + $0x5d0] sm:$0xff]
  %v198 = vld [vmem:[%s0 + $0x5d8] sm:$0xff]
  %v199 = vld [vmem:[%s0 + $0x5e0] sm:$0xff]
  %v200 = vld [vmem:[%s0 + $0x5e8] sm:$0xff]
  %v201 = vld [vmem:[%s0 + $0x5f0] sm:$0xff]
  %v202 = vld [vmem:[%s0 + $0x5f8] sm:$0xff]
  %v203 = vld [vmem:[%s0 + $0x600] sm:$0xff]
  %v204 = vld [vmem:[%s0 + $0x608] sm:$0xff]
  %v205 = vld [vmem:[%s0 + $0x610] sm:$0xff]
  %v206 = vld [vmem:[%s0 + $0x618] sm:$0xff]
  %v207 = vld [vmem:[%s0 + $0x620] sm:$0xff]
  %v208 = vld [vmem:[%s0 + $0x628] sm:$0xff]
  %v209 = vld [vmem:[%s0 + $0x630] sm:$0xff]
  %v210 = vld [vmem:[%s0 + $0x638] sm:$0xff]
  %v211 = vld [vmem:[%s0 + $0x640] sm:$0xff]
  %v212 = vld [vmem:[%s0 + $0x648] sm:$0xff]
  %v213 = vld [vmem:[%s0 + $0x650] sm:$0xff]
  %v214 = vld [vmem:[%s0 + $0x658] sm:$0xff]
  %v215 = vld [vmem:[%s0 + $0x660] sm:$0xff]
  %v216 = vld [vmem:[%s0 + $0x668] sm:$0xff]
  %v217 = vld [vmem:[%s0 + $0x670] sm:$0xff]
  %v218 = vld [vmem:[%s0 + $0x678] sm:$0xff]
  %v219 = vld [vmem:[%s0 + $0x680] sm:$0xff]
  %v220 = vld [vmem:[%s0 + $0x688] sm:$0xff]
  %v221 = vld [vmem:[%s0 + $0x690] sm:$0xff]
  %v222 = vld [vmem:[%s0 + $0x698] sm:$0xff]
  %v223 = vld [vmem:[%s0 + $0x6a0] sm:$0xff]
  %v224 = vld [vmem:[%s0 + $0x6a8] sm:$0xff]
  %v225 = vld [vmem:[%s0 + $0x6b0] sm:$0xff]
  %v226 = vld [vmem:[%s0 + $0x6b8] sm:$0xff]
  %v227 = vld [vmem:[%s0 + $0x6c0] sm:$0xff]
  %v228 = vld [vmem:[%s0 + $0x6c8] sm:$0xff]
  %v229 = vld [vmem:[%s0 + $0x6d0] sm:$0xff]
  %v230 = vld [vmem:[%s0 + $0x6d8] sm:$0xff]
  %v231 = vld [vmem:[%s0 + $0x6e0] sm:$0xff]
  %v232 = vld [vmem:[%s0 + $0x6e8] sm:$0xff]
  %v233 = vld [vmem:[%s0 + $0x6f0] sm:$0xff]
  %v234 = vld [vmem:[%s0 + $0x6f8] sm:$0xff]
  %v235 = vld [vmem:[%s0 + $0x700] sm:$0xff]
  %v236 = vld [vmem:[%s0 + $0x708] sm:$0xff]
  %v237 = vld [vmem:[%s0 + $0x710] sm:$0xff]
  %v238 = vld [vmem:[%s0 + $0x718] sm:$0xff]
  %v239 = vld [vmem:[%s0 + $0x720] sm:$0xff]
  %v240 = vld [vmem:[%s0 + $0x728] sm:$0xff]
  %v241 = vld [vmem:[%s0 + $0x730] sm:$0xff]
  %v242 = vld [vmem:[%s0 + $0x738] sm:$0xff]
  %v243 = vld [vmem:[%s0 + $0x740] sm:$0xff]
  %v244 = vld [vmem:[%s0 + $0x748] sm:$0xff]
  %v245 = vld [vmem:[%s0 + $0x750] sm:$0xff]
  %v246 = vld [vmem:[%s0 + $0x758] sm:$0xff]
  %v247 = vld [vmem:[%s0 + $0x760] sm:$0xff]
  %v248 = vld [vmem:[%s0 + $0x768] sm:$0xff]
  %v249 = vld [vmem:[%s0 + $0x770] sm:$0xff]
  %v250 = vld [vmem:[%s0 + $0x778] sm:$0xff]
  %v251 = vld [vmem:[%s0 + $0x780] sm:$0xff]
  %v252 = vld [vmem:[%s0 + $0x788] sm:$0xff]
  %v253 = vld [vmem:[%s0 + $0x790] sm:$0xff]
  %v254 = vld [vmem:[%s0 + $0x798] sm:$0xff]
  %v255 = vld [vmem:[%s0 + $0x7a0] sm:$0xff]
  %v256 = vld [vmem:[%s0 + $0x7a8] sm:$0xff]
  %v257 = vld [vmem:[%s0 + $0x7b0] sm:$0xff]
  %v258 = vld [vmem:[%s0 + $0x7b8] sm:$0xff]
  %v259 = vld [vmem:[%s0 + $0x7c0] sm:$0xff]
  %v260 = vld [vmem:[%s0 + $0x7c8] sm:$0xff]
  %v261 = vld [vmem:[%s0 + $0x7d0] sm:$0xff]
  %v262 = vld [vmem:[%s0 + $0x7d8] sm:$0xff]
  %v263 = vld [vmem:[%s0 + $0x7e0] sm:$0xff]
  %v264 = vld [vmem:[%s0 + $0x7e8] sm:$0xff]
  %v265 = vld [vmem:[%s0 + $0x7f0] sm:$0xff]
  %v266 = vld [vmem:[%s0 + $0x7f8] sm:$0xff]
  %v267 = vld [vmem:[%s0 + $0x800] sm:$0xff]
  %v268 = vld [vmem:[%s0 + $0x808] sm:$0xff]
  %v269 = vld [vmem:[%s0 + $0x810] sm:$0xff]
  %v270 = vld [vmem:[%s0 + $0x818] sm:$0xff]
  %v271 = vld [vmem:[%s0 + $0x820] sm:$0xff]
  %v272 = vld [vmem:[%s0 + $0x828] sm:$0xff]
  %v273 = vld [vmem:[%s0 + $0x830] sm:$0xff]
  %v274 = vld [vmem:[%s0 + $0x838] sm:$0xff]
  %v275 = vld [vmem:[%s1] sm:$0xff]
  %v276 = vld [vmem:[%s1 + $0x8] sm:$0xff]
  %v277 = vld [vmem:[%s1 + $0x10] sm:$0xff]
  %v278 = vld [vmem:[%s1 + $0x18] sm:$0xff]
  %v279 = vld [vmem:[%s1 + $0x20] sm:$0xff]
  %v280 = vld [vmem:[%s1 + $0x28] sm:$0xff]
  %v281 = vld [vmem:[%s1 + $0x30] sm:$0xff]
  %v282 = vld [vmem:[%s1 + $0x38] sm:$0xff]
  %v283 = vld [vmem:[%s1 + $0x40] sm:$0xff]
  %v284 = vld [vmem:[%s1 + $0x48] sm:$0xff]
  %v285 = vld [vmem:[%s1 + $0x50] sm:$0xff]
  %v286 = vld [vmem:[%s1 + $0x58] sm:$0xff]
  %v287 = vld [vmem:[%s1 + $0x60] sm:$0xff]
  %v288 = vld [vmem:[%s1 + $0x68] sm:$0xff]
  %v289 = vld [vmem:[%s1 + $0x70] sm:$0xff]
  %v290 = vld [vmem:[%s1 + $0x78] sm:$0xff]
  %v291 = vld [vmem:[%s1 + $0x80] sm:$0xff]
  %v292 = vld [vmem:[%s1 + $0x88] sm:$0xff]
  %v293 = vld [vmem:[%s1 + $0x90] sm:$0xff]
  %v294 = vld [vmem:[%s1 + $0x98] sm:$0xff]
  %v295 = vld [vmem:[%s1 + $0xa0] sm:$0xff]
  %v296 = vld [vmem:[%s1 + $0xa8] sm:$0xff]
  %v297 = vld [vmem:[%s1 + $0xb0] sm:$0xff]
  %v298 = vld [vmem:[%s1 + $0xb8] sm:$0xff]
  %v299 = vld [vmem:[%s1 + $0xc0] sm:$0xff]
  %v300 = vld [vmem:[%s1 + $0xc8] sm:$0xff]
  %v301 = vld [vmem:[%s1 + $0xd0] sm:$0xff]
  %v302 = vld [vmem:[%s1 + $0xd8] sm:$0xff]
  %v303 = vld [vmem:[%s1 + $0xe0] sm:$0xff]
  %v304 = vld [vmem:[%s1 + $0xe8] sm:$0xff]
  %v305 = vld [vmem:[%s1 + $0xf0] sm:$0xff]
  %v306 = vld [vmem:[%s1 + $0xf8] sm:$0xff]
  %v307 = vld [vmem:[%s1 + $0x100] sm:$0xff]
  %v308 = vld [vmem:[%s1 + $0x108] sm:$0xff]
  %v309 = vld [vmem:[%s1 + $0x110] sm:$0xff]
  %v310 = vld [vmem:[%s1 + $0x118] sm:$0xff]
  %v311 = vld [vmem:[%s1 + $0x120] sm:$0xff]
  %v312 = vld [vmem:[%s1 + $0x128] sm:$0xff]
  %v313 = vld [vmem:[%s1 + $0x130] sm:$0xff]
  %v314 = vld [vmem:[%s1 + $0x138] sm:$0xff]
  %v315 = vld [vmem:[%s1 + $0x140] sm:$0xff]
  %v316 = vld [vmem:[%s1 + $0x148] sm:$0xff]
  %v317 = vld [vmem:[%s1 + $0x150] sm:$0xff]
  %v318 = vld [vmem:[%s1 + $0x158] sm:$0xff]
  %vm319 = vcmask 392192
  %v321 = vsel %vm319, %v12, 0
  %v324 = vsel %vm319, %v14, 0
  %v327 = vsel %vm319, %v16, 0
  %v330 = vsel %vm319, %v18, 0
  %v333 = vsel %vm319, %v20, 0
  %v336 = vsel %vm319, %v22, 0
  %v339 = vsel %vm319, %v24, 0
  %v342 = vsel %vm319, %v26, 0
  %v345 = vsel %vm319, %v28, 0
  %v348 = vsel %vm319, %v30, 0
  %v351 = vsel %vm319, %v32, 0
  %v354 = vsel %vm319, %v34, 0
  %v357 = vsel %vm319, %v36, 0
  %v360 = vsel %vm319, %v38, 0
  %v363 = vsel %vm319, %v40, 0
  %v366 = vsel %vm319, %v42, 0
  %v369 = vsel %vm319, %v44, 0
  %v372 = vsel %vm319, %v46, 0
  %v375 = vsel %vm319, %v48, 0
  %v378 = vsel %vm319, %v50, 0
  %v381 = vsel %vm319, %v52, 0
  %v384 = vsel %vm319, %v54, 0
  %v387 = vsel %vm319, %v56, 0
  %v390 = vsel %vm319, %v58, 0
  %v393 = vsel %vm319, %v60, 0
  %v396 = vsel %vm319, %v62, 0
  %v399 = vsel %vm319, %v64, 0
  %v402 = vsel %vm319, %v66, 0
  %v405 = vsel %vm319, %v68, 0
  %v408 = vsel %vm319, %v70, 0
  %v411 = vsel %vm319, %v72, 0
  %v414 = vsel %vm319, %v74, 0
  %v417 = vsel %vm319, %v76, 0
  %v420 = vsel %vm319, %v78, 0
  %v423 = vsel %vm319, %v80, 0
  %v426 = vsel %vm319, %v82, 0
  %v429 = vsel %vm319, %v84, 0
  %v432 = vsel %vm319, %v86, 0
  %v435 = vsel %vm319, %v88, 0
  %v438 = vsel %vm319, %v90, 0
  %v441 = vsel %vm319, %v92, 0
  %v444 = vsel %vm319, %v94, 0
  %v447 = vsel %vm319, %v96, 0
  %v450 = vsel %vm319, %v98, 0
  %v453 = vsel %vm319, %v100, 0
  %v456 = vsel %vm319, %v102, 0
  %v459 = vsel %vm319, %v104, 0
  %v462 = vsel %vm319, %v106, 0
  %v465 = vsel %vm319, %v108, 0
  %v468 = vsel %vm319, %v110, 0
  %v471 = vsel %vm319, %v112, 0
  %v474 = vsel %vm319, %v114, 0
  %v477 = vsel %vm319, %v116, 0
  %v480 = vsel %vm319, %v118, 0
  %v483 = vsel %vm319, %v120, 0
  %v486 = vsel %vm319, %v122, 0
  %v489 = vsel %vm319, %v124, 0
  %v492 = vsel %vm319, %v126, 0
  %v495 = vsel %vm319, %v128, 0
  %v498 = vsel %vm319, %v130, 0
  %v501 = vsel %vm319, %v132, 0
  %v504 = vsel %vm319, %v134, 0
  %v507 = vsel %vm319, %v136, 0
  %v510 = vsel %vm319, %v138, 0
  %v513 = vsel %vm319, %v140, 0
  %v516 = vsel %vm319, %v142, 0
  %v519 = vsel %vm319, %v144, 0
  %v522 = vsel %vm319, %v146, 0
  %v525 = vsel %vm319, %v148, 0
  %v528 = vsel %vm319, %v150, 0
  %v531 = vsel %vm319, %v152, 0
  %v534 = vsel %vm319, %v154, 0
  %v537 = vsel %vm319, %v156, 0
  %v540 = vsel %vm319, %v158, 0
  %v543 = vsel %vm319, %v160, 0
  %v546 = vsel %vm319, %v162, 0
  %v549 = vsel %vm319, %v164, 0
  %v552 = vsel %vm319, %v166, 0
  %v555 = vsel %vm319, %v168, 0
  %v558 = vsel %vm319, %v170, 0
  %v561 = vsel %vm319, %v172, 0
  %v564 = vsel %vm319, %v174, 0
  %v567 = vsel %vm319, %v176, 0
  %v570 = vsel %vm319, %v178, 0
  %v573 = vsel %vm319, %v180, 0
  %v576 = vsel %vm319, %v182, 0
  %v579 = vsel %vm319, %v184, 0
  %v582 = vsel %vm319, %v186, 0
  %v585 = vsel %vm319, %v188, 0
  %v588 = vsel %vm319, %v190, 0
  %v591 = vsel %vm319, %v192, 0
  %v594 = vsel %vm319, %v194, 0
  %v597 = vsel %vm319, %v196, 0
  %v600 = vsel %vm319, %v198, 0
  %v603 = vsel %vm319, %v200, 0
  %v606 = vsel %vm319, %v202, 0
  %v609 = vsel %vm319, %v204, 0
  %v612 = vsel %vm319, %v206, 0
  %v615 = vsel %vm319, %v208, 0
  %v618 = vsel %vm319, %v210, 0
  %v621 = vsel %vm319, %v212, 0
  %v624 = vsel %vm319, %v214, 0
  %v627 = vsel %vm319, %v216, 0
  %v630 = vsel %vm319, %v218, 0
  %v633 = vsel %vm319, %v220, 0
  %v636 = vsel %vm319, %v222, 0
  %v639 = vsel %vm319, %v224, 0
  %v642 = vsel %vm319, %v226, 0
  %v645 = vsel %vm319, %v228, 0
  %v648 = vsel %vm319, %v230, 0
  %v651 = vsel %vm319, %v232, 0
  %v654 = vsel %vm319, %v234, 0
  %v657 = vsel %vm319, %v236, 0
  %v660 = vsel %vm319, %v238, 0
  %v663 = vsel %vm319, %v240, 0
  %v666 = vsel %vm319, %v242, 0
  %v669 = vsel %vm319, %v244, 0
  %v672 = vsel %vm319, %v246, 0
  %v675 = vsel %vm319, %v248, 0
  %v678 = vsel %vm319, %v250, 0
  %v681 = vsel %vm319, %v252, 0
  %v684 = vsel %vm319, %v254, 0
  %v687 = vsel %vm319, %v256, 0
  %v690 = vsel %vm319, %v258, 0
  %v693 = vsel %vm319, %v260, 0
  %v696 = vsel %vm319, %v262, 0
  %v699 = vsel %vm319, %v264, 0
  %v702 = vsel %vm319, %v266, 0
  %v705 = vsel %vm319, %v268, 0
  %v708 = vsel %vm319, %v270, 0
  %v711 = vsel %vm319, %v272, 0
  %v714 = vsel %vm319, %v274, 0
  %716 = vmatprep.subr.mxu0 %v306
  %717 = vmatpush1.msra.mxu0 %v305
  %718 = vmatprep.subr.mxu0 %v304
  %719 = vmatpush1.msra.mxu0 %v303
  %720 = vmatprep.subr.mxu0 %v302
  %721 = vmatpush1.msra.mxu0 %v301
  %722 = vmatprep.subr.mxu0 %v300
  %723 = vmatpush1.msra.mxu0 %v299
  %724 = vmatprep.subr.mxu0 %v298
  %725 = vmatpush1.msra.mxu0 %v297
  %726 = vmatprep.subr.mxu0 %v296
  %727 = vmatpush1.msra.mxu0 %v295
  %728 = vmatprep.subr.mxu0 %v294
  %729 = vmatpush1.msra.mxu0 %v293
  %730 = vmatprep.subr.mxu0 %v292
  %731 = vmatpush1.msra.mxu0 %v291
  %732 = vmatprep.subr.mxu0 %v290
  %733 = vmatpush1.msra.mxu0 %v289
  %734 = vmatprep.subr.mxu0 %v288
  %735 = vmatpush1.msra.mxu0 %v287
  %736 = vmatprep.subr.mxu0 %v286
  %737 = vmatpush1.msra.mxu0 %v285
  %738 = vmatprep.subr.mxu0 %v284
  %739 = vmatpush1.msra.mxu0 %v283
  %740 = vmatprep.subr.mxu0 %v282
  %741 = vmatpush1.msra.mxu0 %v281
  %742 = vmatprep.subr.mxu0 %v280
  %743 = vmatpush1.msra.mxu0 %v279
  %744 = vmatprep.subr.mxu0 %v278
  %745 = vmatpush1.msra.mxu0 %v277
  %746 = vmatprep.subr.mxu0 %v276
  %747 = vmatpush1.msra.mxu0 %v275
  %748 = vmatprep.subr.mxu0 0.0
  %749 = vmatpush2.msra.mxu0 0.0
  %750 = vmatprep.subr.mxu0 0.0
  %751 = vmatpush2.msra.mxu0 0.0
  %752 = vmatprep.subr.mxu0 0.0
  %753 = vmatpush2.msra.mxu0 0.0
  %754 = vmatprep.subr.mxu0 0.0
  %755 = vmatpush2.msra.mxu0 0.0
  %756 = vmatprep.subr.mxu0 0.0
  %757 = vmatpush2.msra.mxu0 0.0
  %758 = vmatprep.subr.mxu0 0.0
  %759 = vmatpush2.msra.mxu0 0.0
  %760 = vmatprep.subr.mxu0 0.0
  %761 = vmatpush2.msra.mxu0 0.0
  %762 = vmatprep.subr.mxu0 0.0
  %763 = vmatpush2.msra.mxu0 0.0
  %764 = vmatprep.subr.mxu0 0.0
  %765 = vmatpush2.msra.mxu0 0.0
  %766 = vmatprep.subr.mxu0 0.0
  %767 = vmatpush2.msra.mxu0 0.0
  %768 = vmatprep.subr.mxu0 %v318
  %769 = vmatpush2.msra.mxu0 %v317
  %770 = vmatprep.subr.mxu0 %v316
  %771 = vmatpush2.msra.mxu0 %v315
  %772 = vmatprep.subr.mxu0 %v314
  %773 = vmatpush2.msra.mxu0 %v313
  %774 = vmatprep.subr.mxu0 %v312
  %775 = vmatpush2.msra.mxu0 %v311
  %776 = vmatprep.subr.mxu0 %v310
  %777 = vmatpush2.msra.mxu0 %v309
  %778 = vmatprep.subr.mxu0 %v308
  %779 = vmatpush2.msra.mxu0 %v307
  %780 = vmatprep.mubr.f32.mxu0 %v321
  %781 = vmatmul.mubr.f32.gmra.mxu0 %v11
  %v782 = vpop.f32.mrf.mxu0
  %v783 = vadd.f32 0.0, %v782
  %v784 = vpop.f32.mrf.mxu0
  %v785 = vadd.f32 0.0, %v784
  %786 = vmatprep.mubr.f32.mxu0 %v324
  %787 = vmatmul.mubr.f32.gmra.mxu0 %v13
  %v788 = vpop.f32.mrf.mxu0
  %v789 = vadd.f32 0.0, %v788
  %v790 = vpop.f32.mrf.mxu0
  %v791 = vadd.f32 0.0, %v790
  %792 = vmatprep.mubr.f32.mxu0 %v327
  %793 = vmatmul.mubr.f32.gmra.mxu0 %v15
  %v794 = vpop.f32.mrf.mxu0
  %v795 = vadd.f32 0.0, %v794
  %v796 = vpop.f32.mrf.mxu0
  %v797 = vadd.f32 0.0, %v796
  %798 = vmatprep.mubr.f32.mxu0 %v330
  %799 = vmatmul.mubr.f32.gmra.mxu0 %v17
  %v800 = vpop.f32.mrf.mxu0
  %v801 = vadd.f32 0.0, %v800
  %v802 = vpop.f32.mrf.mxu0
  %v803 = vadd.f32 0.0, %v802
  %804 = vmatprep.mubr.f32.mxu0 %v333
  %805 = vmatmul.mubr.f32.gmra.mxu0 %v19
  %v806 = vpop.f32.mrf.mxu0
  %v807 = vadd.f32 0.0, %v806
  %v808 = vpop.f32.mrf.mxu0
  %v809 = vadd.f32 0.0, %v808
  %810 = vmatprep.mubr.f32.mxu0 %v336
  %811 = vmatmul.mubr.f32.gmra.mxu0 %v21
  %v812 = vpop.f32.mrf.mxu0
  %v813 = vadd.f32 0.0, %v812
  %v814 = vpop.f32.mrf.mxu0
  %v815 = vadd.f32 0.0, %v814
  %816 = vmatprep.mubr.f32.mxu0 %v339
  %817 = vmatmul.mubr.f32.gmra.mxu0 %v23
  %v818 = vpop.f32.mrf.mxu0
  %v819 = vadd.f32 0.0, %v818
  %v820 = vpop.f32.mrf.mxu0
  %v821 = vadd.f32 0.0, %v820
  %822 = vmatprep.mubr.f32.mxu0 %v342
  %823 = vmatmul.mubr.f32.gmra.mxu0 %v25
  %v824 = vpop.f32.mrf.mxu0
  %v825 = vadd.f32 0.0, %v824
  %v826 = vpop.f32.mrf.mxu0
  %v827 = vadd.f32 0.0, %v826
  %828 = vmatprep.mubr.f32.mxu0 %v345
  %829 = vmatmul.mubr.f32.gmra.mxu0 %v27
  %v830 = vpop.f32.mrf.mxu0
  %v831 = vadd.f32 0.0, %v830
  %v832 = vpop.f32.mrf.mxu0
  %v833 = vadd.f32 0.0, %v832
  %834 = vmatprep.mubr.f32.mxu0 %v348
  %835 = vmatmul.mubr.f32.gmra.mxu0 %v29
  %v836 = vpop.f32.mrf.mxu0
  %v837 = vadd.f32 0.0, %v836
  %v838 = vpop.f32.mrf.mxu0
  %v839 = vadd.f32 0.0, %v838
  %840 = vmatprep.mubr.f32.mxu0 %v351
  %841 = vmatmul.mubr.f32.gmra.mxu0 %v31
  %v842 = vpop.f32.mrf.mxu0
  %v843 = vadd.f32 0.0, %v842
  %v844 = vpop.f32.mrf.mxu0
  %v845 = vadd.f32 0.0, %v844
  %846 = vmatprep.mubr.f32.mxu0 %v354
  %847 = vmatmul.mubr.f32.gmra.mxu0 %v33
  %v848 = vpop.f32.mrf.mxu0
  %v849 = vadd.f32 0.0, %v848
  %v850 = vpop.f32.mrf.mxu0
  %v851 = vadd.f32 0.0, %v850
  %852 = vmatprep.mubr.f32.mxu0 %v357
  %853 = vmatmul.mubr.f32.gmra.mxu0 %v35
  %v854 = vpop.f32.mrf.mxu0
  %v855 = vadd.f32 0.0, %v854
  %v856 = vpop.f32.mrf.mxu0
  %v857 = vadd.f32 0.0, %v856
  %858 = vmatprep.mubr.f32.mxu0 %v360
  %859 = vmatmul.mubr.f32.gmra.mxu0 %v37
  %v860 = vpop.f32.mrf.mxu0
  %v861 = vadd.f32 0.0, %v860
  %v862 = vpop.f32.mrf.mxu0
  %v863 = vadd.f32 0.0, %v862
  %864 = vmatprep.mubr.f32.mxu0 %v363
  %865 = vmatmul.mubr.f32.gmra.mxu0 %v39
  %v866 = vpop.f32.mrf.mxu0
  %v867 = vadd.f32 0.0, %v866
  %v868 = vpop.f32.mrf.mxu0
  %v869 = vadd.f32 0.0, %v868
  %870 = vmatprep.mubr.f32.mxu0 %v366
  %871 = vmatmul.mubr.f32.gmra.mxu0 %v41
  %v872 = vpop.f32.mrf.mxu0
  %v873 = vadd.f32 0.0, %v872
  %v874 = vpop.f32.mrf.mxu0
  %v875 = vadd.f32 0.0, %v874
  %876 = vmatprep.mubr.f32.mxu0 %v369
  %877 = vmatmul.mubr.f32.gmra.mxu0 %v43
  %v878 = vpop.f32.mrf.mxu0
  %v879 = vadd.f32 0.0, %v878
  %v880 = vpop.f32.mrf.mxu0
  %v881 = vadd.f32 0.0, %v880
  %882 = vmatprep.mubr.f32.mxu0 %v372
  %883 = vmatmul.mubr.f32.gmra.mxu0 %v45
  %v884 = vpop.f32.mrf.mxu0
  %v885 = vadd.f32 0.0, %v884
  %v886 = vpop.f32.mrf.mxu0
  %v887 = vadd.f32 0.0, %v886
  %888 = vmatprep.mubr.f32.mxu0 %v375
  %889 = vmatmul.mubr.f32.gmra.mxu0 %v47
  %v890 = vpop.f32.mrf.mxu0
  %v891 = vadd.f32 0.0, %v890
  %v892 = vpop.f32.mrf.mxu0
  %v893 = vadd.f32 0.0, %v892
  %894 = vmatprep.mubr.f32.mxu0 %v378
  %895 = vmatmul.mubr.f32.gmra.mxu0 %v49
  %v896 = vpop.f32.mrf.mxu0
  %v897 = vadd.f32 0.0, %v896
  %v898 = vpop.f32.mrf.mxu0
  %v899 = vadd.f32 0.0, %v898
  %900 = vmatprep.mubr.f32.mxu0 %v381
  %901 = vmatmul.mubr.f32.gmra.mxu0 %v51
  %v902 = vpop.f32.mrf.mxu0
  %v903 = vadd.f32 0.0, %v902
  %v904 = vpop.f32.mrf.mxu0
  %v905 = vadd.f32 0.0, %v904
  %906 = vmatprep.mubr.f32.mxu0 %v384
  %907 = vmatmul.mubr.f32.gmra.mxu0 %v53
  %v908 = vpop.f32.mrf.mxu0
  %v909 = vadd.f32 0.0, %v908
  %v910 = vpop.f32.mrf.mxu0
  %v911 = vadd.f32 0.0, %v910
  %912 = vmatprep.mubr.f32.mxu0 %v387
  %913 = vmatmul.mubr.f32.gmra.mxu0 %v55
  %v914 = vpop.f32.mrf.mxu0
  %v915 = vadd.f32 0.0, %v914
  %v916 = vpop.f32.mrf.mxu0
  %v917 = vadd.f32 0.0, %v916
  %918 = vmatprep.mubr.f32.mxu0 %v390
  %919 = vmatmul.mubr.f32.gmra.mxu0 %v57
  %v920 = vpop.f32.mrf.mxu0
  %v921 = vadd.f32 0.0, %v920
  %v922 = vpop.f32.mrf.mxu0
  %v923 = vadd.f32 0.0, %v922
  %924 = vmatprep.mubr.f32.mxu0 %v393
  %925 = vmatmul.mubr.f32.gmra.mxu0 %v59
  %v926 = vpop.f32.mrf.mxu0
  %v927 = vadd.f32 0.0, %v926
  %v928 = vpop.f32.mrf.mxu0
  %v929 = vadd.f32 0.0, %v928
  %930 = vmatprep.mubr.f32.mxu0 %v396
  %931 = vmatmul.mubr.f32.gmra.mxu0 %v61
  %v932 = vpop.f32.mrf.mxu0
  %v933 = vadd.f32 0.0, %v932
  %v934 = vpop.f32.mrf.mxu0
  %v935 = vadd.f32 0.0, %v934
  %936 = vmatprep.mubr.f32.mxu0 %v399
  %937 = vmatmul.mubr.f32.gmra.mxu0 %v63
  %v938 = vpop.f32.mrf.mxu0
  %v939 = vadd.f32 0.0, %v938
  %v940 = vpop.f32.mrf.mxu0
  %v941 = vadd.f32 0.0, %v940
  %942 = vmatprep.mubr.f32.mxu0 %v402
  %943 = vmatmul.mubr.f32.gmra.mxu0 %v65
  %v944 = vpop.f32.mrf.mxu0
  %v945 = vadd.f32 0.0, %v944
  %v946 = vpop.f32.mrf.mxu0
  %v947 = vadd.f32 0.0, %v946
  %948 = vmatprep.mubr.f32.mxu0 %v405
  %949 = vmatmul.mubr.f32.gmra.mxu0 %v67
  %v950 = vpop.f32.mrf.mxu0
  %v951 = vadd.f32 0.0, %v950
  %v952 = vpop.f32.mrf.mxu0
  %v953 = vadd.f32 0.0, %v952
  %954 = vmatprep.mubr.f32.mxu0 %v408
  %955 = vmatmul.mubr.f32.gmra.mxu0 %v69
  %v956 = vpop.f32.mrf.mxu0
  %v957 = vadd.f32 0.0, %v956
  %v958 = vpop.f32.mrf.mxu0
  %v959 = vadd.f32 0.0, %v958
  %960 = vmatprep.mubr.f32.mxu0 %v411
  %961 = vmatmul.mubr.f32.gmra.mxu0 %v71
  %v962 = vpop.f32.mrf.mxu0
  %v963 = vadd.f32 0.0, %v962
  %v964 = vpop.f32.mrf.mxu0
  %v965 = vadd.f32 0.0, %v964
  %966 = vmatprep.mubr.f32.mxu0 %v414
  %967 = vmatmul.mubr.f32.gmra.mxu0 %v73
  %v968 = vpop.f32.mrf.mxu0
  %v969 = vadd.f32 0.0, %v968
  %v970 = vpop.f32.mrf.mxu0
  %v971 = vadd.f32 0.0, %v970
  %972 = vmatprep.mubr.f32.mxu0 %v417
  %973 = vmatmul.mubr.f32.gmra.mxu0 %v75
  %v974 = vpop.f32.mrf.mxu0
  %v975 = vadd.f32 0.0, %v974
  %v976 = vpop.f32.mrf.mxu0
  %v977 = vadd.f32 0.0, %v976
  %978 = vmatprep.mubr.f32.mxu0 %v420
  %979 = vmatmul.mubr.f32.gmra.mxu0 %v77
  %v980 = vpop.f32.mrf.mxu0
  %v981 = vadd.f32 0.0, %v980
  %v982 = vpop.f32.mrf.mxu0
  %v983 = vadd.f32 0.0, %v982
  %984 = vmatprep.mubr.f32.mxu0 %v423
  %985 = vmatmul.mubr.f32.gmra.mxu0 %v79
  %v986 = vpop.f32.mrf.mxu0
  %v987 = vadd.f32 0.0, %v986
  %v988 = vpop.f32.mrf.mxu0
  %v989 = vadd.f32 0.0, %v988
  %990 = vmatprep.mubr.f32.mxu0 %v426
  %991 = vmatmul.mubr.f32.gmra.mxu0 %v81
  %v992 = vpop.f32.mrf.mxu0
  %v993 = vadd.f32 0.0, %v992
  %v994 = vpop.f32.mrf.mxu0
  %v995 = vadd.f32 0.0, %v994
  %996 = vmatprep.mubr.f32.mxu0 %v429
  %997 = vmatmul.mubr.f32.gmra.mxu0 %v83
  %v998 = vpop.f32.mrf.mxu0
  %v999 = vadd.f32 0.0, %v998
  %v1000 = vpop.f32.mrf.mxu0
  %v1001 = vadd.f32 0.0, %v1000
  %1002 = vmatprep.mubr.f32.mxu0 %v432
  %1003 = vmatmul.mubr.f32.gmra.mxu0 %v85
  %v1004 = vpop.f32.mrf.mxu0
  %v1005 = vadd.f32 0.0, %v1004
  %v1006 = vpop.f32.mrf.mxu0
  %v1007 = vadd.f32 0.0, %v1006
  %1008 = vmatprep.mubr.f32.mxu0 %v435
  %1009 = vmatmul.mubr.f32.gmra.mxu0 %v87
  %v1010 = vpop.f32.mrf.mxu0
  %v1011 = vadd.f32 0.0, %v1010
  %v1012 = vpop.f32.mrf.mxu0
  %v1013 = vadd.f32 0.0, %v1012
  %1014 = vmatprep.mubr.f32.mxu0 %v438
  %1015 = vmatmul.mubr.f32.gmra.mxu0 %v89
  %v1016 = vpop.f32.mrf.mxu0
  %v1017 = vadd.f32 0.0, %v1016
  %v1018 = vpop.f32.mrf.mxu0
  %v1019 = vadd.f32 0.0, %v1018
  %1020 = vmatprep.mubr.f32.mxu0 %v441
  %1021 = vmatmul.mubr.f32.gmra.mxu0 %v91
  %v1022 = vpop.f32.mrf.mxu0
  %v1023 = vadd.f32 0.0, %v1022
  %v1024 = vpop.f32.mrf.mxu0
  %v1025 = vadd.f32 0.0, %v1024
  %1026 = vmatprep.mubr.f32.mxu0 %v444
  %1027 = vmatmul.mubr.f32.gmra.mxu0 %v93
  %v1028 = vpop.f32.mrf.mxu0
  %v1029 = vadd.f32 0.0, %v1028
  %v1030 = vpop.f32.mrf.mxu0
  %v1031 = vadd.f32 0.0, %v1030
  %1032 = vmatprep.mubr.f32.mxu0 %v447
  %1033 = vmatmul.mubr.f32.gmra.mxu0 %v95
  %v1034 = vpop.f32.mrf.mxu0
  %v1035 = vadd.f32 0.0, %v1034
  %v1036 = vpop.f32.mrf.mxu0
  %v1037 = vadd.f32 0.0, %v1036
  %1038 = vmatprep.mubr.f32.mxu0 %v450
  %1039 = vmatmul.mubr.f32.gmra.mxu0 %v97
  %v1040 = vpop.f32.mrf.mxu0
  %v1041 = vadd.f32 0.0, %v1040
  %v1042 = vpop.f32.mrf.mxu0
  %v1043 = vadd.f32 0.0, %v1042
  %1044 = vmatprep.mubr.f32.mxu0 %v453
  %1045 = vmatmul.mubr.f32.gmra.mxu0 %v99
  %v1046 = vpop.f32.mrf.mxu0
  %v1047 = vadd.f32 0.0, %v1046
  %v1048 = vpop.f32.mrf.mxu0
  %v1049 = vadd.f32 0.0, %v1048
  %1050 = vmatprep.mubr.f32.mxu0 %v456
  %1051 = vmatmul.mubr.f32.gmra.mxu0 %v101
  %v1052 = vpop.f32.mrf.mxu0
  %v1053 = vadd.f32 0.0, %v1052
  %v1054 = vpop.f32.mrf.mxu0
  %v1055 = vadd.f32 0.0, %v1054
  %1056 = vmatprep.mubr.f32.mxu0 %v459
  %1057 = vmatmul.mubr.f32.gmra.mxu0 %v103
  %v1058 = vpop.f32.mrf.mxu0
  %v1059 = vadd.f32 0.0, %v1058
  %v1060 = vpop.f32.mrf.mxu0
  %v1061 = vadd.f32 0.0, %v1060
  %1062 = vmatprep.mubr.f32.mxu0 %v462
  %1063 = vmatmul.mubr.f32.gmra.mxu0 %v105
  %v1064 = vpop.f32.mrf.mxu0
  %v1065 = vadd.f32 0.0, %v1064
  %v1066 = vpop.f32.mrf.mxu0
  %v1067 = vadd.f32 0.0, %v1066
  %1068 = vmatprep.mubr.f32.mxu0 %v465
  %1069 = vmatmul.mubr.f32.gmra.mxu0 %v107
  %v1070 = vpop.f32.mrf.mxu0
  %v1071 = vadd.f32 0.0, %v1070
  %v1072 = vpop.f32.mrf.mxu0
  %v1073 = vadd.f32 0.0, %v1072
  %1074 = vmatprep.mubr.f32.mxu0 %v468
  %1075 = vmatmul.mubr.f32.gmra.mxu0 %v109
  %v1076 = vpop.f32.mrf.mxu0
  %v1077 = vadd.f32 0.0, %v1076
  %v1078 = vpop.f32.mrf.mxu0
  %v1079 = vadd.f32 0.0, %v1078
  %1080 = vmatprep.mubr.f32.mxu0 %v471
  %1081 = vmatmul.mubr.f32.gmra.mxu0 %v111
  %v1082 = vpop.f32.mrf.mxu0
  %v1083 = vadd.f32 0.0, %v1082
  %v1084 = vpop.f32.mrf.mxu0
  %v1085 = vadd.f32 0.0, %v1084
  %1086 = vmatprep.mubr.f32.mxu0 %v474
  %1087 = vmatmul.mubr.f32.gmra.mxu0 %v113
  %v1088 = vpop.f32.mrf.mxu0
  %v1089 = vadd.f32 0.0, %v1088
  %v1090 = vpop.f32.mrf.mxu0
  %v1091 = vadd.f32 0.0, %v1090
  %1092 = vmatprep.mubr.f32.mxu0 %v477
  %1093 = vmatmul.mubr.f32.gmra.mxu0 %v115
  %v1094 = vpop.f32.mrf.mxu0
  %v1095 = vadd.f32 0.0, %v1094
  %v1096 = vpop.f32.mrf.mxu0
  %v1097 = vadd.f32 0.0, %v1096
  %1098 = vmatprep.mubr.f32.mxu0 %v480
  %1099 = vmatmul.mubr.f32.gmra.mxu0 %v117
  %v1100 = vpop.f32.mrf.mxu0
  %v1101 = vadd.f32 0.0, %v1100
  %v1102 = vpop.f32.mrf.mxu0
  %v1103 = vadd.f32 0.0, %v1102
  %1104 = vmatprep.mubr.f32.mxu0 %v483
  %1105 = vmatmul.mubr.f32.gmra.mxu0 %v119
  %v1106 = vpop.f32.mrf.mxu0
  %v1107 = vadd.f32 0.0, %v1106
  %v1108 = vpop.f32.mrf.mxu0
  %v1109 = vadd.f32 0.0, %v1108
  %1110 = vmatprep.mubr.f32.mxu0 %v486
  %1111 = vmatmul.mubr.f32.gmra.mxu0 %v121
  %v1112 = vpop.f32.mrf.mxu0
  %v1113 = vadd.f32 0.0, %v1112
  %v1114 = vpop.f32.mrf.mxu0
  %v1115 = vadd.f32 0.0, %v1114
  %1116 = vmatprep.mubr.f32.mxu0 %v489
  %1117 = vmatmul.mubr.f32.gmra.mxu0 %v123
  %v1118 = vpop.f32.mrf.mxu0
  %v1119 = vadd.f32 0.0, %v1118
  %v1120 = vpop.f32.mrf.mxu0
  %v1121 = vadd.f32 0.0, %v1120
  %1122 = vmatprep.mubr.f32.mxu0 %v492
  %1123 = vmatmul.mubr.f32.gmra.mxu0 %v125
  %v1124 = vpop.f32.mrf.mxu0
  %v1125 = vadd.f32 0.0, %v1124
  %v1126 = vpop.f32.mrf.mxu0
  %v1127 = vadd.f32 0.0, %v1126
  %1128 = vmatprep.mubr.f32.mxu0 %v495
  %1129 = vmatmul.mubr.f32.gmra.mxu0 %v127
  %v1130 = vpop.f32.mrf.mxu0
  %v1131 = vadd.f32 0.0, %v1130
  %v1132 = vpop.f32.mrf.mxu0
  %v1133 = vadd.f32 0.0, %v1132
  %1134 = vmatprep.mubr.f32.mxu0 %v498
  %1135 = vmatmul.mubr.f32.gmra.mxu0 %v129
  %v1136 = vpop.f32.mrf.mxu0
  %v1137 = vadd.f32 0.0, %v1136
  %v1138 = vpop.f32.mrf.mxu0
  %v1139 = vadd.f32 0.0, %v1138
  %1140 = vmatprep.mubr.f32.mxu0 %v501
  %1141 = vmatmul.mubr.f32.gmra.mxu0 %v131
  %v1142 = vpop.f32.mrf.mxu0
  %v1143 = vadd.f32 0.0, %v1142
  %v1144 = vpop.f32.mrf.mxu0
  %v1145 = vadd.f32 0.0, %v1144
  %1146 = vmatprep.mubr.f32.mxu0 %v504
  %1147 = vmatmul.mubr.f32.gmra.mxu0 %v133
  %v1148 = vpop.f32.mrf.mxu0
  %v1149 = vadd.f32 0.0, %v1148
  %v1150 = vpop.f32.mrf.mxu0
  %v1151 = vadd.f32 0.0, %v1150
  %1152 = vmatprep.mubr.f32.mxu0 %v507
  %1153 = vmatmul.mubr.f32.gmra.mxu0 %v135
  %v1154 = vpop.f32.mrf.mxu0
  %v1155 = vadd.f32 0.0, %v1154
  %v1156 = vpop.f32.mrf.mxu0
  %v1157 = vadd.f32 0.0, %v1156
  %1158 = vmatprep.mubr.f32.mxu0 %v510
  %1159 = vmatmul.mubr.f32.gmra.mxu0 %v137
  %v1160 = vpop.f32.mrf.mxu0
  %v1161 = vadd.f32 0.0, %v1160
  %v1162 = vpop.f32.mrf.mxu0
  %v1163 = vadd.f32 0.0, %v1162
  %1164 = vmatprep.mubr.f32.mxu0 %v513
  %1165 = vmatmul.mubr.f32.gmra.mxu0 %v139
  %v1166 = vpop.f32.mrf.mxu0
  %v1167 = vadd.f32 0.0, %v1166
  %v1168 = vpop.f32.mrf.mxu0
  %v1169 = vadd.f32 0.0, %v1168
  %1170 = vmatprep.mubr.f32.mxu0 %v516
  %1171 = vmatmul.mubr.f32.gmra.mxu0 %v141
  %v1172 = vpop.f32.mrf.mxu0
  %v1173 = vadd.f32 0.0, %v1172
  %v1174 = vpop.f32.mrf.mxu0
  %v1175 = vadd.f32 0.0, %v1174
  %1176 = vmatprep.mubr.f32.mxu0 %v519
  %1177 = vmatmul.mubr.f32.gmra.mxu0 %v143
  %v1178 = vpop.f32.mrf.mxu0
  %v1179 = vadd.f32 0.0, %v1178
  %v1180 = vpop.f32.mrf.mxu0
  %v1181 = vadd.f32 0.0, %v1180
  %1182 = vmatprep.mubr.f32.mxu0 %v522
  %1183 = vmatmul.mubr.f32.gmra.mxu0 %v145
  %v1184 = vpop.f32.mrf.mxu0
  %v1185 = vadd.f32 0.0, %v1184
  %v1186 = vpop.f32.mrf.mxu0
  %v1187 = vadd.f32 0.0, %v1186
  %1188 = vmatprep.mubr.f32.mxu0 %v525
  %1189 = vmatmul.mubr.f32.gmra.mxu0 %v147
  %v1190 = vpop.f32.mrf.mxu0
  %v1191 = vadd.f32 0.0, %v1190
  %v1192 = vpop.f32.mrf.mxu0
  %v1193 = vadd.f32 0.0, %v1192
  %1194 = vmatprep.mubr.f32.mxu0 %v528
  %1195 = vmatmul.mubr.f32.gmra.mxu0 %v149
  %v1196 = vpop.f32.mrf.mxu0
  %v1197 = vadd.f32 0.0, %v1196
  %v1198 = vpop.f32.mrf.mxu0
  %v1199 = vadd.f32 0.0, %v1198
  %1200 = vmatprep.mubr.f32.mxu0 %v531
  %1201 = vmatmul.mubr.f32.gmra.mxu0 %v151
  %v1202 = vpop.f32.mrf.mxu0
  %v1203 = vadd.f32 0.0, %v1202
  %v1204 = vpop.f32.mrf.mxu0
  %v1205 = vadd.f32 0.0, %v1204
  %1206 = vmatprep.mubr.f32.mxu0 %v534
  %1207 = vmatmul.mubr.f32.gmra.mxu0 %v153
  %v1208 = vpop.f32.mrf.mxu0
  %v1209 = vadd.f32 0.0, %v1208
  %v1210 = vpop.f32.mrf.mxu0
  %v1211 = vadd.f32 0.0, %v1210
  %1212 = vmatprep.mubr.f32.mxu0 %v537
  %1213 = vmatmul.mubr.f32.gmra.mxu0 %v155
  %v1214 = vpop.f32.mrf.mxu0
  %v1215 = vadd.f32 0.0, %v1214
  %v1216 = vpop.f32.mrf.mxu0
  %v1217 = vadd.f32 0.0, %v1216
  %1218 = vmatprep.mubr.f32.mxu0 %v540
  %1219 = vmatmul.mubr.f32.gmra.mxu0 %v157
  %v1220 = vpop.f32.mrf.mxu0
  %v1221 = vadd.f32 0.0, %v1220
  %v1222 = vpop.f32.mrf.mxu0
  %v1223 = vadd.f32 0.0, %v1222
  %1224 = vmatprep.mubr.f32.mxu0 %v543
  %1225 = vmatmul.mubr.f32.gmra.mxu0 %v159
  %v1226 = vpop.f32.mrf.mxu0
  %v1227 = vadd.f32 0.0, %v1226
  %v1228 = vpop.f32.mrf.mxu0
  %v1229 = vadd.f32 0.0, %v1228
  %1230 = vmatprep.mubr.f32.mxu0 %v546
  %1231 = vmatmul.mubr.f32.gmra.mxu0 %v161
  %v1232 = vpop.f32.mrf.mxu0
  %v1233 = vadd.f32 0.0, %v1232
  %v1234 = vpop.f32.mrf.mxu0
  %v1235 = vadd.f32 0.0, %v1234
  %1236 = vmatprep.mubr.f32.mxu0 %v549
  %1237 = vmatmul.mubr.f32.gmra.mxu0 %v163
  %v1238 = vpop.f32.mrf.mxu0
  %v1239 = vadd.f32 0.0, %v1238
  %v1240 = vpop.f32.mrf.mxu0
  %v1241 = vadd.f32 0.0, %v1240
  %1242 = vmatprep.mubr.f32.mxu0 %v552
  %1243 = vmatmul.mubr.f32.gmra.mxu0 %v165
  %v1244 = vpop.f32.mrf.mxu0
  %v1245 = vadd.f32 0.0, %v1244
  %v1246 = vpop.f32.mrf.mxu0
  %v1247 = vadd.f32 0.0, %v1246
  %1248 = vmatprep.mubr.f32.mxu0 %v555
  %1249 = vmatmul.mubr.f32.gmra.mxu0 %v167
  %v1250 = vpop.f32.mrf.mxu0
  %v1251 = vadd.f32 0.0, %v1250
  %v1252 = vpop.f32.mrf.mxu0
  %v1253 = vadd.f32 0.0, %v1252
  %1254 = vmatprep.mubr.f32.mxu0 %v558
  %1255 = vmatmul.mubr.f32.gmra.mxu0 %v169
  %v1256 = vpop.f32.mrf.mxu0
  %v1257 = vadd.f32 0.0, %v1256
  %v1258 = vpop.f32.mrf.mxu0
  %v1259 = vadd.f32 0.0, %v1258
  %1260 = vmatprep.mubr.f32.mxu0 %v561
  %1261 = vmatmul.mubr.f32.gmra.mxu0 %v171
  %v1262 = vpop.f32.mrf.mxu0
  %v1263 = vadd.f32 0.0, %v1262
  %v1264 = vpop.f32.mrf.mxu0
  %v1265 = vadd.f32 0.0, %v1264
  %1266 = vmatprep.mubr.f32.mxu0 %v564
  %1267 = vmatmul.mubr.f32.gmra.mxu0 %v173
  %v1268 = vpop.f32.mrf.mxu0
  %v1269 = vadd.f32 0.0, %v1268
  %v1270 = vpop.f32.mrf.mxu0
  %v1271 = vadd.f32 0.0, %v1270
  %1272 = vmatprep.mubr.f32.mxu0 %v567
  %1273 = vmatmul.mubr.f32.gmra.mxu0 %v175
  %v1274 = vpop.f32.mrf.mxu0
  %v1275 = vadd.f32 0.0, %v1274
  %v1276 = vpop.f32.mrf.mxu0
  %v1277 = vadd.f32 0.0, %v1276
  %1278 = vmatprep.mubr.f32.mxu0 %v570
  %1279 = vmatmul.mubr.f32.gmra.mxu0 %v177
  %v1280 = vpop.f32.mrf.mxu0
  %v1281 = vadd.f32 0.0, %v1280
  %v1282 = vpop.f32.mrf.mxu0
  %v1283 = vadd.f32 0.0, %v1282
  %1284 = vmatprep.mubr.f32.mxu0 %v573
  %1285 = vmatmul.mubr.f32.gmra.mxu0 %v179
  %v1286 = vpop.f32.mrf.mxu0
  %v1287 = vadd.f32 0.0, %v1286
  %v1288 = vpop.f32.mrf.mxu0
  %v1289 = vadd.f32 0.0, %v1288
  %1290 = vmatprep.mubr.f32.mxu0 %v576
  %1291 = vmatmul.mubr.f32.gmra.mxu0 %v181
  %v1292 = vpop.f32.mrf.mxu0
  %v1293 = vadd.f32 0.0, %v1292
  %v1294 = vpop.f32.mrf.mxu0
  %v1295 = vadd.f32 0.0, %v1294
  %1296 = vmatprep.mubr.f32.mxu0 %v579
  %1297 = vmatmul.mubr.f32.gmra.mxu0 %v183
  %v1298 = vpop.f32.mrf.mxu0
  %v1299 = vadd.f32 0.0, %v1298
  %v1300 = vpop.f32.mrf.mxu0
  %v1301 = vadd.f32 0.0, %v1300
  %1302 = vmatprep.mubr.f32.mxu0 %v582
  %1303 = vmatmul.mubr.f32.gmra.mxu0 %v185
  %v1304 = vpop.f32.mrf.mxu0
  %v1305 = vadd.f32 0.0, %v1304
  %v1306 = vpop.f32.mrf.mxu0
  %v1307 = vadd.f32 0.0, %v1306
  %1308 = vmatprep.mubr.f32.mxu0 %v585
  %1309 = vmatmul.mubr.f32.gmra.mxu0 %v187
  %v1310 = vpop.f32.mrf.mxu0
  %v1311 = vadd.f32 0.0, %v1310
  %v1312 = vpop.f32.mrf.mxu0
  %v1313 = vadd.f32 0.0, %v1312
  %1314 = vmatprep.mubr.f32.mxu0 %v588
  %1315 = vmatmul.mubr.f32.gmra.mxu0 %v189
  %v1316 = vpop.f32.mrf.mxu0
  %v1317 = vadd.f32 0.0, %v1316
  %v1318 = vpop.f32.mrf.mxu0
  %v1319 = vadd.f32 0.0, %v1318
  %1320 = vmatprep.mubr.f32.mxu0 %v591
  %1321 = vmatmul.mubr.f32.gmra.mxu0 %v191
  %v1322 = vpop.f32.mrf.mxu0
  %v1323 = vadd.f32 0.0, %v1322
  %v1324 = vpop.f32.mrf.mxu0
  %v1325 = vadd.f32 0.0, %v1324
  %1326 = vmatprep.mubr.f32.mxu0 %v594
  %1327 = vmatmul.mubr.f32.gmra.mxu0 %v193
  %v1328 = vpop.f32.mrf.mxu0
  %v1329 = vadd.f32 0.0, %v1328
  %v1330 = vpop.f32.mrf.mxu0
  %v1331 = vadd.f32 0.0, %v1330
  %1332 = vmatprep.mubr.f32.mxu0 %v597
  %1333 = vmatmul.mubr.f32.gmra.mxu0 %v195
  %v1334 = vpop.f32.mrf.mxu0
  %v1335 = vadd.f32 0.0, %v1334
  %v1336 = vpop.f32.mrf.mxu0
  %v1337 = vadd.f32 0.0, %v1336
  %1338 = vmatprep.mubr.f32.mxu0 %v600
  %1339 = vmatmul.mubr.f32.gmra.mxu0 %v197
  %v1340 = vpop.f32.mrf.mxu0
  %v1341 = vadd.f32 0.0, %v1340
  %v1342 = vpop.f32.mrf.mxu0
  %v1343 = vadd.f32 0.0, %v1342
  %1344 = vmatprep.mubr.f32.mxu0 %v603
  %1345 = vmatmul.mubr.f32.gmra.mxu0 %v199
  %v1346 = vpop.f32.mrf.mxu0
  %v1347 = vadd.f32 0.0, %v1346
  %v1348 = vpop.f32.mrf.mxu0
  %v1349 = vadd.f32 0.0, %v1348
  %1350 = vmatprep.mubr.f32.mxu0 %v606
  %1351 = vmatmul.mubr.f32.gmra.mxu0 %v201
  %v1352 = vpop.f32.mrf.mxu0
  %v1353 = vadd.f32 0.0, %v1352
  %v1354 = vpop.f32.mrf.mxu0
  %v1355 = vadd.f32 0.0, %v1354
  %1356 = vmatprep.mubr.f32.mxu0 %v609
  %1357 = vmatmul.mubr.f32.gmra.mxu0 %v203
  %v1358 = vpop.f32.mrf.mxu0
  %v1359 = vadd.f32 0.0, %v1358
  %v1360 = vpop.f32.mrf.mxu0
  %v1361 = vadd.f32 0.0, %v1360
  %1362 = vmatprep.mubr.f32.mxu0 %v612
  %1363 = vmatmul.mubr.f32.gmra.mxu0 %v205
  %v1364 = vpop.f32.mrf.mxu0
  %v1365 = vadd.f32 0.0, %v1364
  %v1366 = vpop.f32.mrf.mxu0
  %v1367 = vadd.f32 0.0, %v1366
  %1368 = vmatprep.mubr.f32.mxu0 %v615
  %1369 = vmatmul.mubr.f32.gmra.mxu0 %v207
  %v1370 = vpop.f32.mrf.mxu0
  %v1371 = vadd.f32 0.0, %v1370
  %v1372 = vpop.f32.mrf.mxu0
  %v1373 = vadd.f32 0.0, %v1372
  %1374 = vmatprep.mubr.f32.mxu0 %v618
  %1375 = vmatmul.mubr.f32.gmra.mxu0 %v209
  %v1376 = vpop.f32.mrf.mxu0
  %v1377 = vadd.f32 0.0, %v1376
  %v1378 = vpop.f32.mrf.mxu0
  %v1379 = vadd.f32 0.0, %v1378
  %1380 = vmatprep.mubr.f32.mxu0 %v621
  %1381 = vmatmul.mubr.f32.gmra.mxu0 %v211
  %v1382 = vpop.f32.mrf.mxu0
  %v1383 = vadd.f32 0.0, %v1382
  %v1384 = vpop.f32.mrf.mxu0
  %v1385 = vadd.f32 0.0, %v1384
  %1386 = vmatprep.mubr.f32.mxu0 %v624
  %1387 = vmatmul.mubr.f32.gmra.mxu0 %v213
  %v1388 = vpop.f32.mrf.mxu0
  %v1389 = vadd.f32 0.0, %v1388
  %v1390 = vpop.f32.mrf.mxu0
  %v1391 = vadd.f32 0.0, %v1390
  %1392 = vmatprep.mubr.f32.mxu0 %v627
  %1393 = vmatmul.mubr.f32.gmra.mxu0 %v215
  %v1394 = vpop.f32.mrf.mxu0
  %v1395 = vadd.f32 0.0, %v1394
  %v1396 = vpop.f32.mrf.mxu0
  %v1397 = vadd.f32 0.0, %v1396
  %1398 = vmatprep.mubr.f32.mxu0 %v630
  %1399 = vmatmul.mubr.f32.gmra.mxu0 %v217
  %v1400 = vpop.f32.mrf.mxu0
  %v1401 = vadd.f32 0.0, %v1400
  %v1402 = vpop.f32.mrf.mxu0
  %v1403 = vadd.f32 0.0, %v1402
  %1404 = vmatprep.mubr.f32.mxu0 %v633
  %1405 = vmatmul.mubr.f32.gmra.mxu0 %v219
  %v1406 = vpop.f32.mrf.mxu0
  %v1407 = vadd.f32 0.0, %v1406
  %v1408 = vpop.f32.mrf.mxu0
  %v1409 = vadd.f32 0.0, %v1408
  %1410 = vmatprep.mubr.f32.mxu0 %v636
  %1411 = vmatmul.mubr.f32.gmra.mxu0 %v221
  %v1412 = vpop.f32.mrf.mxu0
  %v1413 = vadd.f32 0.0, %v1412
  %v1414 = vpop.f32.mrf.mxu0
  %v1415 = vadd.f32 0.0, %v1414
  %1416 = vmatprep.mubr.f32.mxu0 %v639
  %1417 = vmatmul.mubr.f32.gmra.mxu0 %v223
  %v1418 = vpop.f32.mrf.mxu0
  %v1419 = vadd.f32 0.0, %v1418
  %v1420 = vpop.f32.mrf.mxu0
  %v1421 = vadd.f32 0.0, %v1420
  %1422 = vmatprep.mubr.f32.mxu0 %v642
  %1423 = vmatmul.mubr.f32.gmra.mxu0 %v225
  %v1424 = vpop.f32.mrf.mxu0
  %v1425 = vadd.f32 0.0, %v1424
  %v1426 = vpop.f32.mrf.mxu0
  %v1427 = vadd.f32 0.0, %v1426
  %1428 = vmatprep.mubr.f32.mxu0 %v645
  %1429 = vmatmul.mubr.f32.gmra.mxu0 %v227
  %v1430 = vpop.f32.mrf.mxu0
  %v1431 = vadd.f32 0.0, %v1430
  %v1432 = vpop.f32.mrf.mxu0
  %v1433 = vadd.f32 0.0, %v1432
  %1434 = vmatprep.mubr.f32.mxu0 %v648
  %1435 = vmatmul.mubr.f32.gmra.mxu0 %v229
  %v1436 = vpop.f32.mrf.mxu0
  %v1437 = vadd.f32 0.0, %v1436
  %v1438 = vpop.f32.mrf.mxu0
  %v1439 = vadd.f32 0.0, %v1438
  %1440 = vmatprep.mubr.f32.mxu0 %v651
  %1441 = vmatmul.mubr.f32.gmra.mxu0 %v231
  %v1442 = vpop.f32.mrf.mxu0
  %v1443 = vadd.f32 0.0, %v1442
  %v1444 = vpop.f32.mrf.mxu0
  %v1445 = vadd.f32 0.0, %v1444
  %1446 = vmatprep.mubr.f32.mxu0 %v654
  %1447 = vmatmul.mubr.f32.gmra.mxu0 %v233
  %v1448 = vpop.f32.mrf.mxu0
  %v1449 = vadd.f32 0.0, %v1448
  %v1450 = vpop.f32.mrf.mxu0
  %v1451 = vadd.f32 0.0, %v1450
  %1452 = vmatprep.mubr.f32.mxu0 %v657
  %1453 = vmatmul.mubr.f32.gmra.mxu0 %v235
  %v1454 = vpop.f32.mrf.mxu0
  %v1455 = vadd.f32 0.0, %v1454
  %v1456 = vpop.f32.mrf.mxu0
  %v1457 = vadd.f32 0.0, %v1456
  %1458 = vmatprep.mubr.f32.mxu0 %v660
  %1459 = vmatmul.mubr.f32.gmra.mxu0 %v237
  %v1460 = vpop.f32.mrf.mxu0
  %v1461 = vadd.f32 0.0, %v1460
  %v1462 = vpop.f32.mrf.mxu0
  %v1463 = vadd.f32 0.0, %v1462
  %1464 = vmatprep.mubr.f32.mxu0 %v663
  %1465 = vmatmul.mubr.f32.gmra.mxu0 %v239
  %v1466 = vpop.f32.mrf.mxu0
  %v1467 = vadd.f32 0.0, %v1466
  %v1468 = vpop.f32.mrf.mxu0
  %v1469 = vadd.f32 0.0, %v1468
  %1470 = vmatprep.mubr.f32.mxu0 %v666
  %1471 = vmatmul.mubr.f32.gmra.mxu0 %v241
  %v1472 = vpop.f32.mrf.mxu0
  %v1473 = vadd.f32 0.0, %v1472
  %v1474 = vpop.f32.mrf.mxu0
  %v1475 = vadd.f32 0.0, %v1474
  %1476 = vmatprep.mubr.f32.mxu0 %v669
  %1477 = vmatmul.mubr.f32.gmra.mxu0 %v243
  %v1478 = vpop.f32.mrf.mxu0
  %v1479 = vadd.f32 0.0, %v1478
  %v1480 = vpop.f32.mrf.mxu0
  %v1481 = vadd.f32 0.0, %v1480
  %1482 = vmatprep.mubr.f32.mxu0 %v672
  %1483 = vmatmul.mubr.f32.gmra.mxu0 %v245
  %v1484 = vpop.f32.mrf.mxu0
  %v1485 = vadd.f32 0.0, %v1484
  %v1486 = vpop.f32.mrf.mxu0
  %v1487 = vadd.f32 0.0, %v1486
  %1488 = vmatprep.mubr.f32.mxu0 %v675
  %1489 = vmatmul.mubr.f32.gmra.mxu0 %v247
  %v1490 = vpop.f32.mrf.mxu0
  %v1491 = vadd.f32 0.0, %v1490
  %v1492 = vpop.f32.mrf.mxu0
  %v1493 = vadd.f32 0.0, %v1492
  %1494 = vmatprep.mubr.f32.mxu0 %v678
  %1495 = vmatmul.mubr.f32.gmra.mxu0 %v249
  %v1496 = vpop.f32.mrf.mxu0
  %v1497 = vadd.f32 0.0, %v1496
  %v1498 = vpop.f32.mrf.mxu0
  %v1499 = vadd.f32 0.0, %v1498
  %1500 = vmatprep.mubr.f32.mxu0 %v681
  %1501 = vmatmul.mubr.f32.gmra.mxu0 %v251
  %v1502 = vpop.f32.mrf.mxu0
  %v1503 = vadd.f32 0.0, %v1502
  %v1504 = vpop.f32.mrf.mxu0
  %v1505 = vadd.f32 0.0, %v1504
  %1506 = vmatprep.mubr.f32.mxu0 %v684
  %1507 = vmatmul.mubr.f32.gmra.mxu0 %v253
  %v1508 = vpop.f32.mrf.mxu0
  %v1509 = vadd.f32 0.0, %v1508
  %v1510 = vpop.f32.mrf.mxu0
  %v1511 = vadd.f32 0.0, %v1510
  %1512 = vmatprep.mubr.f32.mxu0 %v687
  %1513 = vmatmul.mubr.f32.gmra.mxu0 %v255
  %v1514 = vpop.f32.mrf.mxu0
  %v1515 = vadd.f32 0.0, %v1514
  %v1516 = vpop.f32.mrf.mxu0
  %v1517 = vadd.f32 0.0, %v1516
  %1518 = vmatprep.mubr.f32.mxu0 %v690
  %1519 = vmatmul.mubr.f32.gmra.mxu0 %v257
  %v1520 = vpop.f32.mrf.mxu0
  %v1521 = vadd.f32 0.0, %v1520
  %v1522 = vpop.f32.mrf.mxu0
  %v1523 = vadd.f32 0.0, %v1522
  %1524 = vmatprep.mubr.f32.mxu0 %v693
  %1525 = vmatmul.mubr.f32.gmra.mxu0 %v259
  %v1526 = vpop.f32.mrf.mxu0
  %v1527 = vadd.f32 0.0, %v1526
  %v1528 = vpop.f32.mrf.mxu0
  %v1529 = vadd.f32 0.0, %v1528
  %1530 = vmatprep.mubr.f32.mxu0 %v696
  %1531 = vmatmul.mubr.f32.gmra.mxu0 %v261
  %v1532 = vpop.f32.mrf.mxu0
  %v1533 = vadd.f32 0.0, %v1532
  %v1534 = vpop.f32.mrf.mxu0
  %v1535 = vadd.f32 0.0, %v1534
  %1536 = vmatprep.mubr.f32.mxu0 %v699
  %1537 = vmatmul.mubr.f32.gmra.mxu0 %v263
  %v1538 = vpop.f32.mrf.mxu0
  %v1539 = vadd.f32 0.0, %v1538
  %v1540 = vpop.f32.mrf.mxu0
  %v1541 = vadd.f32 0.0, %v1540
  %1542 = vmatprep.mubr.f32.mxu0 %v702
  %1543 = vmatmul.mubr.f32.gmra.mxu0 %v265
  %v1544 = vpop.f32.mrf.mxu0
  %v1545 = vadd.f32 0.0, %v1544
  %v1546 = vpop.f32.mrf.mxu0
  %v1547 = vadd.f32 0.0, %v1546
  %1548 = vmatprep.mubr.f32.mxu0 %v705
  %1549 = vmatmul.mubr.f32.gmra.mxu0 %v267
  %v1550 = vpop.f32.mrf.mxu0
  %v1551 = vadd.f32 0.0, %v1550
  %v1552 = vpop.f32.mrf.mxu0
  %v1553 = vadd.f32 0.0, %v1552
  %1554 = vmatprep.mubr.f32.mxu0 %v708
  %1555 = vmatmul.mubr.f32.gmra.mxu0 %v269
  %v1556 = vpop.f32.mrf.mxu0
  %v1557 = vadd.f32 0.0, %v1556
  %v1558 = vpop.f32.mrf.mxu0
  %v1559 = vadd.f32 0.0, %v1558
  %1560 = vmatprep.mubr.f32.mxu0 %v711
  %1561 = vmatmul.mubr.f32.gmra.mxu0 %v271
  %v1562 = vpop.f32.mrf.mxu0
  %v1563 = vadd.f32 0.0, %v1562
  %v1564 = vpop.f32.mrf.mxu0
  %v1565 = vadd.f32 0.0, %v1564
  %1566 = vmatprep.mubr.f32.mxu0 %v714
  %1567 = vmatmul.mubr.f32.gmra.mxu0 %v273
  %v1568 = vpop.f32.mrf.mxu0
  %v1569 = vadd.f32 0.0, %v1568
  %v1570 = vpop.f32.mrf.mxu0
  %v1571 = vadd.f32 0.0, %v1570
  %1572 = vdwg.mxu0
  %1573 = vst [vmem:[%s2] sm:$0xff] %v783
  %vm1574 = vcmask 556032
  %1575 = vst.msk [vmem:[%s2 + $0x8] sm:$0xff] %vm1574, %v785
  %1576 = vst [vmem:[%s2 + $0x10] sm:$0xff] %v789
  %1577 = vst.msk [vmem:[%s2 + $0x18] sm:$0xff] %vm1574, %v791
  %1578 = vst [vmem:[%s2 + $0x20] sm:$0xff] %v795
  %1579 = vst.msk [vmem:[%s2 + $0x28] sm:$0xff] %vm1574, %v797
  %1580 = vst [vmem:[%s2 + $0x30] sm:$0xff] %v801
  %1581 = vst.msk [vmem:[%s2 + $0x38] sm:$0xff] %vm1574, %v803
  %1582 = vst [vmem:[%s2 + $0x40] sm:$0xff] %v807
  %1583 = vst.msk [vmem:[%s2 + $0x48] sm:$0xff] %vm1574, %v809
  %1584 = vst [vmem:[%s2 + $0x50] sm:$0xff] %v813
  %1585 = vst.msk [vmem:[%s2 + $0x58] sm:$0xff] %vm1574, %v815
  %1586 = vst [vmem:[%s2 + $0x60] sm:$0xff] %v819
  %1587 = vst.msk [vmem:[%s2 + $0x68] sm:$0xff] %vm1574, %v821
  %1588 = vst [vmem:[%s2 + $0x70] sm:$0xff] %v825
  %1589 = vst.msk [vmem:[%s2 + $0x78] sm:$0xff] %vm1574, %v827
  %1590 = vst [vmem:[%s2 + $0x80] sm:$0xff] %v831
  %1591 = vst.msk [vmem:[%s2 + $0x88] sm:$0xff] %vm1574, %v833
  %1592 = vst [vmem:[%s2 + $0x90] sm:$0xff] %v837
  %1593 = vst.msk [vmem:[%s2 + $0x98] sm:$0xff] %vm1574, %v839
  %1594 = vst [vmem:[%s2 + $0xa0] sm:$0xff] %v843
  %1595 = vst.msk [vmem:[%s2 + $0xa8] sm:$0xff] %vm1574, %v845
  %1596 = vst [vmem:[%s2 + $0xb0] sm:$0xff] %v849
  %1597 = vst.msk [vmem:[%s2 + $0xb8] sm:$0xff] %vm1574, %v851
  %1598 = vst [vmem:[%s2 + $0xc0] sm:$0xff] %v855
  %1599 = vst.msk [vmem:[%s2 + $0xc8] sm:$0xff] %vm1574, %v857
  %1600 = vst [vmem:[%s2 + $0xd0] sm:$0xff] %v861
  %1601 = vst.msk [vmem:[%s2 + $0xd8] sm:$0xff] %vm1574, %v863
  %1602 = vst [vmem:[%s2 + $0xe0] sm:$0xff] %v867
  %1603 = vst.msk [vmem:[%s2 + $0xe8] sm:$0xff] %vm1574, %v869
  %1604 = vst [vmem:[%s2 + $0xf0] sm:$0xff] %v873
  %1605 = vst.msk [vmem:[%s2 + $0xf8] sm:$0xff] %vm1574, %v875
  %1606 = vst [vmem:[%s2 + $0x100] sm:$0xff] %v879
  %1607 = vst.msk [vmem:[%s2 + $0x108] sm:$0xff] %vm1574, %v881
  %1608 = vst [vmem:[%s2 + $0x110] sm:$0xff] %v885
  %1609 = vst.msk [vmem:[%s2 + $0x118] sm:$0xff] %vm1574, %v887
  %1610 = vst [vmem:[%s2 + $0x120] sm:$0xff] %v891
  %1611 = vst.msk [vmem:[%s2 + $0x128] sm:$0xff] %vm1574, %v893
  %1612 = vst [vmem:[%s2 + $0x130] sm:$0xff] %v897
  %1613 = vst.msk [vmem:[%s2 + $0x138] sm:$0xff] %vm1574, %v899
  %1614 = vst [vmem:[%s2 + $0x140] sm:$0xff] %v903
  %1615 = vst.msk [vmem:[%s2 + $0x148] sm:$0xff] %vm1574, %v905
  %1616 = vst [vmem:[%s2 + $0x150] sm:$0xff] %v909
  %1617 = vst.msk [vmem:[%s2 + $0x158] sm:$0xff] %vm1574, %v911
  %1618 = vst [vmem:[%s2 + $0x160] sm:$0xff] %v915
  %1619 = vst.msk [vmem:[%s2 + $0x168] sm:$0xff] %vm1574, %v917
  %1620 = vst [vmem:[%s2 + $0x170] sm:$0xff] %v921
  %1621 = vst.msk [vmem:[%s2 + $0x178] sm:$0xff] %vm1574, %v923
  %1622 = vst [vmem:[%s2 + $0x180] sm:$0xff] %v927
  %1623 = vst.msk [vmem:[%s2 + $0x188] sm:$0xff] %vm1574, %v929
  %1624 = vst [vmem:[%s2 + $0x190] sm:$0xff] %v933
  %1625 = vst.msk [vmem:[%s2 + $0x198] sm:$0xff] %vm1574, %v935
  %1626 = vst [vmem:[%s2 + $0x1a0] sm:$0xff] %v939
  %1627 = vst.msk [vmem:[%s2 + $0x1a8] sm:$0xff] %vm1574, %v941
  %1628 = vst [vmem:[%s2 + $0x1b0] sm:$0xff] %v945
  %1629 = vst.msk [vmem:[%s2 + $0x1b8] sm:$0xff] %vm1574, %v947
  %1630 = vst [vmem:[%s2 + $0x1c0] sm:$0xff] %v951
  %1631 = vst.msk [vmem:[%s2 + $0x1c8] sm:$0xff] %vm1574, %v953
  %1632 = vst [vmem:[%s2 + $0x1d0] sm:$0xff] %v957
  %1633 = vst.msk [vmem:[%s2 + $0x1d8] sm:$0xff] %vm1574, %v959
  %1634 = vst [vmem:[%s2 + $0x1e0] sm:$0xff] %v963
  %1635 = vst.msk [vmem:[%s2 + $0x1e8] sm:$0xff] %vm1574, %v965
  %1636 = vst [vmem:[%s2 + $0x1f0] sm:$0xff] %v969
  %1637 = vst.msk [vmem:[%s2 + $0x1f8] sm:$0xff] %vm1574, %v971
  %1638 = vst [vmem:[%s2 + $0x200] sm:$0xff] %v975
  %1639 = vst.msk [vmem:[%s2 + $0x208] sm:$0xff] %vm1574, %v977
  %1640 = vst [vmem:[%s2 + $0x210] sm:$0xff] %v981
  %1641 = vst.msk [vmem:[%s2 + $0x218] sm:$0xff] %vm1574, %v983
  %1642 = vst [vmem:[%s2 + $0x220] sm:$0xff] %v987
  %1643 = vst.msk [vmem:[%s2 + $0x228] sm:$0xff] %vm1574, %v989
  %1644 = vst [vmem:[%s2 + $0x230] sm:$0xff] %v993
  %1645 = vst.msk [vmem:[%s2 + $0x238] sm:$0xff] %vm1574, %v995
  %1646 = vst [vmem:[%s2 + $0x240] sm:$0xff] %v999
  %1647 = vst.msk [vmem:[%s2 + $0x248] sm:$0xff] %vm1574, %v1001
  %1648 = vst [vmem:[%s2 + $0x250] sm:$0xff] %v1005
  %1649 = vst.msk [vmem:[%s2 + $0x258] sm:$0xff] %vm1574, %v1007
  %1650 = vst [vmem:[%s2 + $0x260] sm:$0xff] %v1011
  %1651 = vst.msk [vmem:[%s2 + $0x268] sm:$0xff] %vm1574, %v1013
  %1652 = vst [vmem:[%s2 + $0x270] sm:$0xff] %v1017
  %1653 = vst.msk [vmem:[%s2 + $0x278] sm:$0xff] %vm1574, %v1019
  %1654 = vst [vmem:[%s2 + $0x280] sm:$0xff] %v1023
  %1655 = vst.msk [vmem:[%s2 + $0x288] sm:$0xff] %vm1574, %v1025
  %1656 = vst [vmem:[%s2 + $0x290] sm:$0xff] %v1029
  %1657 = vst.msk [vmem:[%s2 + $0x298] sm:$0xff] %vm1574, %v1031
  %1658 = vst [vmem:[%s2 + $0x2a0] sm:$0xff] %v1035
  %1659 = vst.msk [vmem:[%s2 + $0x2a8] sm:$0xff] %vm1574, %v1037
  %1660 = vst [vmem:[%s2 + $0x2b0] sm:$0xff] %v1041
  %1661 = vst.msk [vmem:[%s2 + $0x2b8] sm:$0xff] %vm1574, %v1043
  %1662 = vst [vmem:[%s2 + $0x2c0] sm:$0xff] %v1047
  %1663 = vst.msk [vmem:[%s2 + $0x2c8] sm:$0xff] %vm1574, %v1049
  %1664 = vst [vmem:[%s2 + $0x2d0] sm:$0xff] %v1053
  %1665 = vst.msk [vmem:[%s2 + $0x2d8] sm:$0xff] %vm1574, %v1055
  %1666 = vst [vmem:[%s2 + $0x2e0] sm:$0xff] %v1059
  %1667 = vst.msk [vmem:[%s2 + $0x2e8] sm:$0xff] %vm1574, %v1061
  %1668 = vst [vmem:[%s2 + $0x2f0] sm:$0xff] %v1065
  %1669 = vst.msk [vmem:[%s2 + $0x2f8] sm:$0xff] %vm1574, %v1067
  %1670 = vst [vmem:[%s2 + $0x300] sm:$0xff] %v1071
  %1671 = vst.msk [vmem:[%s2 + $0x308] sm:$0xff] %vm1574, %v1073
  %1672 = vst [vmem:[%s2 + $0x310] sm:$0xff] %v1077
  %1673 = vst.msk [vmem:[%s2 + $0x318] sm:$0xff] %vm1574, %v1079
  %1674 = vst [vmem:[%s2 + $0x320] sm:$0xff] %v1083
  %1675 = vst.msk [vmem:[%s2 + $0x328] sm:$0xff] %vm1574, %v1085
  %1676 = vst [vmem:[%s2 + $0x330] sm:$0xff] %v1089
  %1677 = vst.msk [vmem:[%s2 + $0x338] sm:$0xff] %vm1574, %v1091
  %1678 = vst [vmem:[%s2 + $0x340] sm:$0xff] %v1095
  %1679 = vst.msk [vmem:[%s2 + $0x348] sm:$0xff] %vm1574, %v1097
  %1680 = vst [vmem:[%s2 + $0x350] sm:$0xff] %v1101
  %1681 = vst.msk [vmem:[%s2 + $0x358] sm:$0xff] %vm1574, %v1103
  %1682 = vst [vmem:[%s2 + $0x360] sm:$0xff] %v1107
  %1683 = vst.msk [vmem:[%s2 + $0x368] sm:$0xff] %vm1574, %v1109
  %1684 = vst [vmem:[%s2 + $0x370] sm:$0xff] %v1113
  %1685 = vst.msk [vmem:[%s2 + $0x378] sm:$0xff] %vm1574, %v1115
  %1686 = vst [vmem:[%s2 + $0x380] sm:$0xff] %v1119
  %1687 = vst.msk [vmem:[%s2 + $0x388] sm:$0xff] %vm1574, %v1121
  %1688 = vst [vmem:[%s2 + $0x390] sm:$0xff] %v1125
  %1689 = vst.msk [vmem:[%s2 + $0x398] sm:$0xff] %vm1574, %v1127
  %1690 = vst [vmem:[%s2 + $0x3a0] sm:$0xff] %v1131
  %1691 = vst.msk [vmem:[%s2 + $0x3a8] sm:$0xff] %vm1574, %v1133
  %1692 = vst [vmem:[%s2 + $0x3b0] sm:$0xff] %v1137
  %1693 = vst.msk [vmem:[%s2 + $0x3b8] sm:$0xff] %vm1574, %v1139
  %1694 = vst [vmem:[%s2 + $0x3c0] sm:$0xff] %v1143
  %1695 = vst.msk [vmem:[%s2 + $0x3c8] sm:$0xff] %vm1574, %v1145
  %1696 = vst [vmem:[%s2 + $0x3d0] sm:$0xff] %v1149
  %1697 = vst.msk [vmem:[%s2 + $0x3d8] sm:$0xff] %vm1574, %v1151
  %1698 = vst [vmem:[%s2 + $0x3e0] sm:$0xff] %v1155
  %1699 = vst.msk [vmem:[%s2 + $0x3e8] sm:$0xff] %vm1574, %v1157
  %1700 = vst [vmem:[%s2 + $0x3f0] sm:$0xff] %v1161
  %1701 = vst.msk [vmem:[%s2 + $0x3f8] sm:$0xff] %vm1574, %v1163
  %1702 = vst [vmem:[%s2 + $0x400] sm:$0xff] %v1167
  %1703 = vst.msk [vmem:[%s2 + $0x408] sm:$0xff] %vm1574, %v1169
  %1704 = vst [vmem:[%s2 + $0x410] sm:$0xff] %v1173
  %1705 = vst.msk [vmem:[%s2 + $0x418] sm:$0xff] %vm1574, %v1175
  %1706 = vst [vmem:[%s2 + $0x420] sm:$0xff] %v1179
  %1707 = vst.msk [vmem:[%s2 + $0x428] sm:$0xff] %vm1574, %v1181
  %1708 = vst [vmem:[%s2 + $0x430] sm:$0xff] %v1185
  %1709 = vst.msk [vmem:[%s2 + $0x438] sm:$0xff] %vm1574, %v1187
  %1710 = vst [vmem:[%s2 + $0x440] sm:$0xff] %v1191
  %1711 = vst.msk [vmem:[%s2 + $0x448] sm:$0xff] %vm1574, %v1193
  %1712 = vst [vmem:[%s2 + $0x450] sm:$0xff] %v1197
  %1713 = vst.msk [vmem:[%s2 + $0x458] sm:$0xff] %vm1574, %v1199
  %1714 = vst [vmem:[%s2 + $0x460] sm:$0xff] %v1203
  %1715 = vst.msk [vmem:[%s2 + $0x468] sm:$0xff] %vm1574, %v1205
  %1716 = vst [vmem:[%s2 + $0x470] sm:$0xff] %v1209
  %1717 = vst.msk [vmem:[%s2 + $0x478] sm:$0xff] %vm1574, %v1211
  %1718 = vst [vmem:[%s2 + $0x480] sm:$0xff] %v1215
  %1719 = vst.msk [vmem:[%s2 + $0x488] sm:$0xff] %vm1574, %v1217
  %1720 = vst [vmem:[%s2 + $0x490] sm:$0xff] %v1221
  %1721 = vst.msk [vmem:[%s2 + $0x498] sm:$0xff] %vm1574, %v1223
  %1722 = vst [vmem:[%s2 + $0x4a0] sm:$0xff] %v1227
  %1723 = vst.msk [vmem:[%s2 + $0x4a8] sm:$0xff] %vm1574, %v1229
  %1724 = vst [vmem:[%s2 + $0x4b0] sm:$0xff] %v1233
  %1725 = vst.msk [vmem:[%s2 + $0x4b8] sm:$0xff] %vm1574, %v1235
  %1726 = vst [vmem:[%s2 + $0x4c0] sm:$0xff] %v1239
  %1727 = vst.msk [vmem:[%s2 + $0x4c8] sm:$0xff] %vm1574, %v1241
  %1728 = vst [vmem:[%s2 + $0x4d0] sm:$0xff] %v1245
  %1729 = vst.msk [vmem:[%s2 + $0x4d8] sm:$0xff] %vm1574, %v1247
  %1730 = vst [vmem:[%s2 + $0x4e0] sm:$0xff] %v1251
  %1731 = vst.msk [vmem:[%s2 + $0x4e8] sm:$0xff] %vm1574, %v1253
  %1732 = vst [vmem:[%s2 + $0x4f0] sm:$0xff] %v1257
  %1733 = vst.msk [vmem:[%s2 + $0x4f8] sm:$0xff] %vm1574, %v1259
  %1734 = vst [vmem:[%s2 + $0x500] sm:$0xff] %v1263
  %1735 = vst.msk [vmem:[%s2 + $0x508] sm:$0xff] %vm1574, %v1265
  %1736 = vst [vmem:[%s2 + $0x510] sm:$0xff] %v1269
  %1737 = vst.msk [vmem:[%s2 + $0x518] sm:$0xff] %vm1574, %v1271
  %1738 = vst [vmem:[%s2 + $0x520] sm:$0xff] %v1275
  %1739 = vst.msk [vmem:[%s2 + $0x528] sm:$0xff] %vm1574, %v1277
  %1740 = vst [vmem:[%s2 + $0x530] sm:$0xff] %v1281
  %1741 = vst.msk [vmem:[%s2 + $0x538] sm:$0xff] %vm1574, %v1283
  %1742 = vst [vmem:[%s2 + $0x540] sm:$0xff] %v1287
  %1743 = vst.msk [vmem:[%s2 + $0x548] sm:$0xff] %vm1574, %v1289
  %1744 = vst [vmem:[%s2 + $0x550] sm:$0xff] %v1293
  %1745 = vst.msk [vmem:[%s2 + $0x558] sm:$0xff] %vm1574, %v1295
  %1746 = vst [vmem:[%s2 + $0x560] sm:$0xff] %v1299
  %1747 = vst.msk [vmem:[%s2 + $0x568] sm:$0xff] %vm1574, %v1301
  %1748 = vst [vmem:[%s2 + $0x570] sm:$0xff] %v1305
  %1749 = vst.msk [vmem:[%s2 + $0x578] sm:$0xff] %vm1574, %v1307
  %1750 = vst [vmem:[%s2 + $0x580] sm:$0xff] %v1311
  %1751 = vst.msk [vmem:[%s2 + $0x588] sm:$0xff] %vm1574, %v1313
  %1752 = vst [vmem:[%s2 + $0x590] sm:$0xff] %v1317
  %1753 = vst.msk [vmem:[%s2 + $0x598] sm:$0xff] %vm1574, %v1319
  %1754 = vst [vmem:[%s2 + $0x5a0] sm:$0xff] %v1323
  %1755 = vst.msk [vmem:[%s2 + $0x5a8] sm:$0xff] %vm1574, %v1325
  %1756 = vst [vmem:[%s2 + $0x5b0] sm:$0xff] %v1329
  %1757 = vst.msk [vmem:[%s2 + $0x5b8] sm:$0xff] %vm1574, %v1331
  %1758 = vst [vmem:[%s2 + $0x5c0] sm:$0xff] %v1335
  %1759 = vst.msk [vmem:[%s2 + $0x5c8] sm:$0xff] %vm1574, %v1337
  %1760 = vst [vmem:[%s2 + $0x5d0] sm:$0xff] %v1341
  %1761 = vst.msk [vmem:[%s2 + $0x5d8] sm:$0xff] %vm1574, %v1343
  %1762 = vst [vmem:[%s2 + $0x5e0] sm:$0xff] %v1347
  %1763 = vst.msk [vmem:[%s2 + $0x5e8] sm:$0xff] %vm1574, %v1349
  %1764 = vst [vmem:[%s2 + $0x5f0] sm:$0xff] %v1353
  %1765 = vst.msk [vmem:[%s2 + $0x5f8] sm:$0xff] %vm1574, %v1355
  %1766 = vst [vmem:[%s2 + $0x600] sm:$0xff] %v1359
  %1767 = vst.msk [vmem:[%s2 + $0x608] sm:$0xff] %vm1574, %v1361
  %1768 = vst [vmem:[%s2 + $0x610] sm:$0xff] %v1365
  %1769 = vst.msk [vmem:[%s2 + $0x618] sm:$0xff] %vm1574, %v1367
  %1770 = vst [vmem:[%s2 + $0x620] sm:$0xff] %v1371
  %1771 = vst.msk [vmem:[%s2 + $0x628] sm:$0xff] %vm1574, %v1373
  %1772 = vst [vmem:[%s2 + $0x630] sm:$0xff] %v1377
  %1773 = vst.msk [vmem:[%s2 + $0x638] sm:$0xff] %vm1574, %v1379
  %1774 = vst [vmem:[%s2 + $0x640] sm:$0xff] %v1383
  %1775 = vst.msk [vmem:[%s2 + $0x648] sm:$0xff] %vm1574, %v1385
  %1776 = vst [vmem:[%s2 + $0x650] sm:$0xff] %v1389
  %1777 = vst.msk [vmem:[%s2 + $0x658] sm:$0xff] %vm1574, %v1391
  %1778 = vst [vmem:[%s2 + $0x660] sm:$0xff] %v1395
  %1779 = vst.msk [vmem:[%s2 + $0x668] sm:$0xff] %vm1574, %v1397
  %1780 = vst [vmem:[%s2 + $0x670] sm:$0xff] %v1401
  %1781 = vst.msk [vmem:[%s2 + $0x678] sm:$0xff] %vm1574, %v1403
  %1782 = vst [vmem:[%s2 + $0x680] sm:$0xff] %v1407
  %1783 = vst.msk [vmem:[%s2 + $0x688] sm:$0xff] %vm1574, %v1409
  %1784 = vst [vmem:[%s2 + $0x690] sm:$0xff] %v1413
  %1785 = vst.msk [vmem:[%s2 + $0x698] sm:$0xff] %vm1574, %v1415
  %1786 = vst [vmem:[%s2 + $0x6a0] sm:$0xff] %v1419
  %1787 = vst.msk [vmem:[%s2 + $0x6a8] sm:$0xff] %vm1574, %v1421
  %1788 = vst [vmem:[%s2 + $0x6b0] sm:$0xff] %v1425
  %1789 = vst.msk [vmem:[%s2 + $0x6b8] sm:$0xff] %vm1574, %v1427
  %1790 = vst [vmem:[%s2 + $0x6c0] sm:$0xff] %v1431
  %1791 = vst.msk [vmem:[%s2 + $0x6c8] sm:$0xff] %vm1574, %v1433
  %1792 = vst [vmem:[%s2 + $0x6d0] sm:$0xff] %v1437
  %1793 = vst.msk [vmem:[%s2 + $0x6d8] sm:$0xff] %vm1574, %v1439
  %1794 = vst [vmem:[%s2 + $0x6e0] sm:$0xff] %v1443
  %1795 = vst.msk [vmem:[%s2 + $0x6e8] sm:$0xff] %vm1574, %v1445
  %1796 = vst [vmem:[%s2 + $0x6f0] sm:$0xff] %v1449
  %1797 = vst.msk [vmem:[%s2 + $0x6f8] sm:$0xff] %vm1574, %v1451
  %1798 = vst [vmem:[%s2 + $0x700] sm:$0xff] %v1455
  %1799 = vst.msk [vmem:[%s2 + $0x708] sm:$0xff] %vm1574, %v1457
  %1800 = vst [vmem:[%s2 + $0x710] sm:$0xff] %v1461
  %1801 = vst.msk [vmem:[%s2 + $0x718] sm:$0xff] %vm1574, %v1463
  %1802 = vst [vmem:[%s2 + $0x720] sm:$0xff] %v1467
  %1803 = vst.msk [vmem:[%s2 + $0x728] sm:$0xff] %vm1574, %v1469
  %1804 = vst [vmem:[%s2 + $0x730] sm:$0xff] %v1473
  %1805 = vst.msk [vmem:[%s2 + $0x738] sm:$0xff] %vm1574, %v1475
  %1806 = vst [vmem:[%s2 + $0x740] sm:$0xff] %v1479
  %1807 = vst.msk [vmem:[%s2 + $0x748] sm:$0xff] %vm1574, %v1481
  %1808 = vst [vmem:[%s2 + $0x750] sm:$0xff] %v1485
  %1809 = vst.msk [vmem:[%s2 + $0x758] sm:$0xff] %vm1574, %v1487
  %1810 = vst [vmem:[%s2 + $0x760] sm:$0xff] %v1491
  %1811 = vst.msk [vmem:[%s2 + $0x768] sm:$0xff] %vm1574, %v1493
  %1812 = vst [vmem:[%s2 + $0x770] sm:$0xff] %v1497
  %1813 = vst.msk [vmem:[%s2 + $0x778] sm:$0xff] %vm1574, %v1499
  %1814 = vst [vmem:[%s2 + $0x780] sm:$0xff] %v1503
  %1815 = vst.msk [vmem:[%s2 + $0x788] sm:$0xff] %vm1574, %v1505
  %1816 = vst [vmem:[%s2 + $0x790] sm:$0xff] %v1509
  %1817 = vst.msk [vmem:[%s2 + $0x798] sm:$0xff] %vm1574, %v1511
  %1818 = vst [vmem:[%s2 + $0x7a0] sm:$0xff] %v1515
  %1819 = vst.msk [vmem:[%s2 + $0x7a8] sm:$0xff] %vm1574, %v1517
  %1820 = vst [vmem:[%s2 + $0x7b0] sm:$0xff] %v1521
  %1821 = vst.msk [vmem:[%s2 + $0x7b8] sm:$0xff] %vm1574, %v1523
  %1822 = vst [vmem:[%s2 + $0x7c0] sm:$0xff] %v1527
  %1823 = vst.msk [vmem:[%s2 + $0x7c8] sm:$0xff] %vm1574, %v1529
  %1824 = vst [vmem:[%s2 + $0x7d0] sm:$0xff] %v1533
  %1825 = vst.msk [vmem:[%s2 + $0x7d8] sm:$0xff] %vm1574, %v1535
  %1826 = vst [vmem:[%s2 + $0x7e0] sm:$0xff] %v1539
  %1827 = vst.msk [vmem:[%s2 + $0x7e8] sm:$0xff] %vm1574, %v1541
  %1828 = vst [vmem:[%s2 + $0x7f0] sm:$0xff] %v1545
  %1829 = vst.msk [vmem:[%s2 + $0x7f8] sm:$0xff] %vm1574, %v1547
  %1830 = vst [vmem:[%s2 + $0x800] sm:$0xff] %v1551
  %1831 = vst.msk [vmem:[%s2 + $0x808] sm:$0xff] %vm1574, %v1553
  %1832 = vst [vmem:[%s2 + $0x810] sm:$0xff] %v1557
  %1833 = vst.msk [vmem:[%s2 + $0x818] sm:$0xff] %vm1574, %v1559
  %1834 = vst [vmem:[%s2 + $0x820] sm:$0xff] %v1563
  %1835 = vst.msk [vmem:[%s2 + $0x828] sm:$0xff] %vm1574, %v1565
  %1836 = vst [vmem:[%s2 + $0x830] sm:$0xff] %v1569
  %1837 = vst.msk [vmem:[%s2 + $0x838] sm:$0xff] %vm1574, %v1571
  // Predicated region
  $region10: #{tpu_custom_call.1} parent=0 // pred_check
    _
  $region11: #{tpu_custom_call.1} parent=0 // pred_check_branch
    %1839 = sbr.rel (0) target = $region13
  $region12: #{tpu_custom_call.1} parent=0 // pred_region
    _
  $region13: #{tpu_custom_call.1} parent=0 // pred_fallthru
    _
  // Predicated region
  $region14: #{tpu_custom_call.1} parent=0 // pred_check
    _
  $region15: #{tpu_custom_call.1} parent=0 // pred_check_branch
    %1841 = sbr.rel (0) target = $region17
  $region16: #{tpu_custom_call.1} parent=0 // pred_region
    _
  $region17: #{tpu_custom_call.1} parent=0 // pred_fallthru
    _

</llo_original>
